<compile_context>
chip_gen: v5e
topology: v5e:2x2
jax: 0.10.0
libtpu: 0.0.40
codegen_flags: <defaults>
</compile_context>

<pallas_src>
import math

import jax
import jax.numpy as jnp
from jax import lax
from jax.experimental import pallas as pl
from jax.experimental.pallas import tpu as pltpu


def _round_up(x, m):
    return ((x + m - 1) // m) * m


def conv_bn_relu_kernel(x_ref, w_ref, scale_ref, bias_ref, o_ref):
    """One image x one output-channel block.

    x_ref:     (1, H+2, W+2, Cin)   spatially pre-padded NHWC input
    w_ref:     (3, 3, Cin, TCo)     conv weights for this C_out block (HWIO)
    scale_ref: (1, TCo)             folded BN scale  = gamma / sqrt(var + eps)
    bias_ref:  (1, TCo)             folded BN bias   = beta - mean * scale
    o_ref:     (1, H, W, TCo)
    """
    H = o_ref.shape[1]
    W = o_ref.shape[2]
    cin = x_ref.shape[3]
    tco = o_ref.shape[3]

    acc = jnp.zeros((H * W, tco), jnp.float32)
    # 3x3 conv as 9 shifted matmuls on the MXU, accumulated in f32.
    for dy in range(3):
        for dx in range(3):
            patch = x_ref[0, dy:dy + H, dx:dx + W, :].reshape(H * W, cin)
            acc = acc + jnp.dot(patch, w_ref[dy, dx, :, :],
                                preferred_element_type=jnp.float32)

    # Folded BatchNorm (per-channel affine) + ReLU.
    y = acc * scale_ref[...] + bias_ref[...]
    y = jnp.maximum(y, 0.0)
    o_ref[...] = y.reshape(1, H, W, tco).astype(o_ref.dtype)


def conv_batchnorm_relu(x_nchw, w_hwio, gamma, beta, running_mean, running_var,
                        *, eps=1e-5, tile_co=None):
    """Inference-mode ConvBatchNorm forward.

    x_nchw : (N, Cin, H, W) float32 (PyTorch layout)
    w_hwio : (3, 3, Cin, Cout) conv weight
    gamma/beta/running_mean/running_var : (Cout,) BatchNorm2d params (eval mode)
    Returns (N, Cout, H, W).
    """
    N, C_in, H, W = x_nchw.shape
    kh, kw, wcin, C_out = w_hwio.shape
    assert (kh, kw) == (3, 3) and wcin == C_in

    # Lane-dense layout: channels last, padded to multiples of 128 lanes.
    cin_p = _round_up(C_in, 128)
    cout_p = _round_up(C_out, 128)
    if tile_co is None:
        tile_co = min(cout_p, 256)
    assert cout_p % tile_co == 0
    n_co_blocks = cout_p // tile_co

    # NCHW -> NHWC, zero-pad spatially by 1, pad channels to cin_p.
    x_nhwc = jnp.transpose(x_nchw, (0, 2, 3, 1))
    x_pad = jnp.pad(x_nhwc, ((0, 0), (1, 1), (1, 1), (0, cin_p - C_in)))

    w_pad = jnp.pad(w_hwio,
                    ((0, 0), (0, 0), (0, cin_p - C_in), (0, cout_p - C_out)))

    # Fold BN (eval mode) into per-channel scale/bias; padded channels -> 0.
    inv_std = 1.0 / jnp.sqrt(running_var + eps)
    scale = gamma * inv_std
    bias = beta - running_mean * scale
    scale_pad = jnp.pad(scale, (0, cout_p - C_out)).reshape(1, cout_p)
    bias_pad = jnp.pad(bias, (0, cout_p - C_out)).reshape(1, cout_p)

    grid = (N, n_co_blocks)

    # Scoped-VMEM sizing from the actual (double-buffered) block footprint.
    bytes_x = (H + 2) * (W + 2) * cin_p * 4
    bytes_w = 9 * cin_p * tile_co * 4
    bytes_o = H * W * tile_co * 4
    vmem_needed = 2 * (bytes_x + bytes_w + bytes_o) + 2 * H * W * tile_co * 4
    vmem_limit = int(min(max(3 * vmem_needed, 16 * 2 ** 20), 64 * 2 ** 20))

    cost = pl.CostEstimate(
        flops=2 * N * H * W * 9 * cin_p * cout_p,
        transcendentals=0,
        bytes_accessed=4 * (x_pad.size + w_pad.size + scale_pad.size
                            + bias_pad.size + N * H * W * cout_p),
    )

    out = pl.pallas_call(
        conv_bn_relu_kernel,
        out_shape=jax.ShapeDtypeStruct((N, H, W, cout_p), x_nchw.dtype),
        grid_spec=pltpu.PrefetchScalarGridSpec(
            num_scalar_prefetch=0,
            grid=grid,
            in_specs=[
                pl.BlockSpec((1, H + 2, W + 2, cin_p),
                             lambda n, j: (n, 0, 0, 0)),
                pl.BlockSpec((3, 3, cin_p, tile_co),
                             lambda n, j: (0, 0, 0, j)),
                pl.BlockSpec((1, tile_co), lambda n, j: (0, j)),
                pl.BlockSpec((1, tile_co), lambda n, j: (0, j)),
            ],
            out_specs=pl.BlockSpec((1, H, W, tile_co),
                                   lambda n, j: (n, 0, 0, j)),
        ),
        compiler_params=pltpu.CompilerParams(
            dimension_semantics=("parallel", "parallel"),
            vmem_limit_bytes=vmem_limit),
        cost_estimate=cost,
    )(x_pad, w_pad, scale_pad, bias_pad)

    # Strip channel padding, back to NCHW.
    out = out[:, :, :, :C_out]
    return jnp.transpose(out, (0, 3, 1, 2))


def reference(x_nchw, w_hwio, gamma, beta, mean, var, eps=1e-5):
    w_oihw = jnp.transpose(w_hwio, (3, 2, 0, 1))
    conv = lax.conv_general_dilated(
        x_nchw, w_oihw, window_strides=(1, 1), padding=((1, 1), (1, 1)),
        dimension_numbers=('NCHW', 'OIHW', 'NCHW'),
        precision=lax.Precision.HIGHEST)
    scale = gamma / jnp.sqrt(var + eps)
    bias = beta - mean * scale
    y = conv * scale[None, :, None, None] + bias[None, :, None, None]
    return jnp.maximum(y, 0.0)


if __name__ == "__main__":
    key = jax.random.PRNGKey(0)
    k_x, k_w, k_g, k_b, k_m, k_v = jax.random.split(key, 6)

    # small shapes: batch=2, in_channels=4, out_channels=8, 16x16 spatial
    N, C_in, C_out, H, W = 2, 4, 8, 16, 16

    x = jax.random.normal(k_x, (N, C_in, H, W), jnp.float32)

    fan_in = C_in * 9
    w = jax.random.normal(k_w, (3, 3, C_in, C_out), jnp.float32) / math.sqrt(fan_in)
    gamma = 1.0 + 0.1 * jax.random.normal(k_g, (C_out,), jnp.float32)
    beta = 0.1 * jax.random.normal(k_b, (C_out,), jnp.float32)
    running_mean = 0.1 * jax.random.normal(k_m, (C_out,), jnp.float32)
    running_var = jnp.abs(1.0 + 0.1 * jax.random.normal(k_v, (C_out,), jnp.float32))

    out = conv_batchnorm_relu(x, w, gamma, beta, running_mean, running_var)
    jax.block_until_ready(out)

    ref = reference(x, w, gamma, beta, running_mean, running_var)
    assert out.shape == ref.shape, (out.shape, ref.shape)
    assert jnp.allclose(out, ref, atol=1e-3, rtol=1e-3), "mismatch vs reference"

    print("KERNEL_OK")
</pallas_src>

<mosaic_0001>
module attributes {stable_mosaic.version = 11 : i64} {
  func.func @conv_bn_relu_kernel(%arg0: i32, %arg1: i32, %arg2: memref<1x18x18x128xf32, #tpu.memory_space<vmem>>, %arg3: memref<3x3x128x128xf32, #tpu.memory_space<vmem>>, %arg4: memref<1x128xf32, #tpu.memory_space<vmem>>, %arg5: memref<1x128xf32, #tpu.memory_space<vmem>>, %arg6: memref<1x16x16x128xf32, #tpu.memory_space<vmem>>) attributes {dimension_semantics = [#tpu.dimension_semantics<parallel>, #tpu.dimension_semantics<parallel>], iteration_bounds = array<i64: 2, 1>, scalar_prefetch = 0 : i64, scratch_operands = 0 : i64, tpu.core_type = #tpu.core_type<tc>, window_params = [{transform_indices = @transform_0, window_bounds = array<i64: 1, 18, 18, 128>}, {transform_indices = @transform_1, window_bounds = array<i64: 3, 3, 128, 128>}, {transform_indices = @transform_2, window_bounds = array<i64: 1, 128>}, {transform_indices = @transform_3, window_bounds = array<i64: 1, 128>}, {transform_indices = @transform_4, window_bounds = array<i64: 1, 16, 16, 128>}]} {
    %cst = arith.constant 0.000000e+00 : f32
    %0 = vector.broadcast %cst : f32 to vector<256x128xf32>
    %c0 = arith.constant 0 : index
    %c0_0 = arith.constant 0 : index
    %c0_1 = arith.constant 0 : index
    %c0_2 = arith.constant 0 : index
    %1 = vector.load %arg2[%c0, %c0_0, %c0_1, %c0_2] : memref<1x18x18x128xf32, #tpu.memory_space<vmem>>, vector<1x16x16x128xf32>
    %2 = vector.shape_cast %1 : vector<1x16x16x128xf32> to vector<16x16x128xf32>
    %3 = vector.shape_cast %2 : vector<16x16x128xf32> to vector<256x128xf32>
    %c0_3 = arith.constant 0 : index
    %c0_4 = arith.constant 0 : index
    %c0_5 = arith.constant 0 : index
    %c0_6 = arith.constant 0 : index
    %4 = vector.load %arg3[%c0_3, %c0_4, %c0_5, %c0_6] : memref<3x3x128x128xf32, #tpu.memory_space<vmem>>, vector<1x1x128x128xf32>
    %5 = vector.shape_cast %4 : vector<1x1x128x128xf32> to vector<128x128xf32>
    %cst_7 = arith.constant dense<0.000000e+00> : vector<256x128xf32>
    %6 = tpu.matmul %3, %5, %cst_7 {dimension_numbers = #tpu.dot_dimension_numbers<[1], [0], [0], [1], [0, 0, 1, 1], [], []>} : vector<256x128xf32>, vector<128x128xf32>, vector<256x128xf32> -> vector<256x128xf32>
    %7 = arith.addf %0, %6 : vector<256x128xf32>
    %c0_8 = arith.constant 0 : index
    %c0_9 = arith.constant 0 : index
    %c1 = arith.constant 1 : index
    %c0_10 = arith.constant 0 : index
    %8 = vector.load %arg2[%c0_8, %c0_9, %c1, %c0_10] : memref<1x18x18x128xf32, #tpu.memory_space<vmem>>, vector<1x16x16x128xf32>
    %9 = vector.shape_cast %8 : vector<1x16x16x128xf32> to vector<16x16x128xf32>
    %10 = vector.shape_cast %9 : vector<16x16x128xf32> to vector<256x128xf32>
    %c0_11 = arith.constant 0 : index
    %c1_12 = arith.constant 1 : index
    %c0_13 = arith.constant 0 : index
    %c0_14 = arith.constant 0 : index
    %11 = vector.load %arg3[%c0_11, %c1_12, %c0_13, %c0_14] : memref<3x3x128x128xf32, #tpu.memory_space<vmem>>, vector<1x1x128x128xf32>
    %12 = vector.shape_cast %11 : vector<1x1x128x128xf32> to vector<128x128xf32>
    %cst_15 = arith.constant dense<0.000000e+00> : vector<256x128xf32>
    %13 = tpu.matmul %10, %12, %cst_15 {dimension_numbers = #tpu.dot_dimension_numbers<[1], [0], [0], [1], [0, 0, 1, 1], [], []>} : vector<256x128xf32>, vector<128x128xf32>, vector<256x128xf32> -> vector<256x128xf32>
    %14 = arith.addf %7, %13 : vector<256x128xf32>
    %c0_16 = arith.constant 0 : index
    %c0_17 = arith.constant 0 : index
    %c2 = arith.constant 2 : index
    %c0_18 = arith.constant 0 : index
    %15 = vector.load %arg2[%c0_16, %c0_17, %c2, %c0_18] : memref<1x18x18x128xf32, #tpu.memory_space<vmem>>, vector<1x16x16x128xf32>
    %16 = vector.shape_cast %15 : vector<1x16x16x128xf32> to vector<16x16x128xf32>
    %17 = vector.shape_cast %16 : vector<16x16x128xf32> to vector<256x128xf32>
    %c0_19 = arith.constant 0 : index
    %c2_20 = arith.constant 2 : index
    %c0_21 = arith.constant 0 : index
    %c0_22 = arith.constant 0 : index
    %18 = vector.load %arg3[%c0_19, %c2_20, %c0_21, %c0_22] : memref<3x3x128x128xf32, #tpu.memory_space<vmem>>, vector<1x1x128x128xf32>
    %19 = vector.shape_cast %18 : vector<1x1x128x128xf32> to vector<128x128xf32>
    %cst_23 = arith.constant dense<0.000000e+00> : vector<256x128xf32>
    %20 = tpu.matmul %17, %19, %cst_23 {dimension_numbers = #tpu.dot_dimension_numbers<[1], [0], [0], [1], [0, 0, 1, 1], [], []>} : vector<256x128xf32>, vector<128x128xf32>, vector<256x128xf32> -> vector<256x128xf32>
    %21 = arith.addf %14, %20 : vector<256x128xf32>
    %c0_24 = arith.constant 0 : index
    %c1_25 = arith.constant 1 : index
    %c0_26 = arith.constant 0 : index
    %c0_27 = arith.constant 0 : index
    %22 = vector.load %arg2[%c0_24, %c1_25, %c0_26, %c0_27] : memref<1x18x18x128xf32, #tpu.memory_space<vmem>>, vector<1x16x16x128xf32>
    %23 = vector.shape_cast %22 : vector<1x16x16x128xf32> to vector<16x16x128xf32>
    %24 = vector.shape_cast %23 : vector<16x16x128xf32> to vector<256x128xf32>
    %c1_28 = arith.constant 1 : index
    %c0_29 = arith.constant 0 : index
    %c0_30 = arith.constant 0 : index
    %c0_31 = arith.constant 0 : index
    %25 = vector.load %arg3[%c1_28, %c0_29, %c0_30, %c0_31] : memref<3x3x128x128xf32, #tpu.memory_space<vmem>>, vector<1x1x128x128xf32>
    %26 = vector.shape_cast %25 : vector<1x1x128x128xf32> to vector<128x128xf32>
    %cst_32 = arith.constant dense<0.000000e+00> : vector<256x128xf32>
    %27 = tpu.matmul %24, %26, %cst_32 {dimension_numbers = #tpu.dot_dimension_numbers<[1], [0], [0], [1], [0, 0, 1, 1], [], []>} : vector<256x128xf32>, vector<128x128xf32>, vector<256x128xf32> -> vector<256x128xf32>
    %28 = arith.addf %21, %27 : vector<256x128xf32>
    %c0_33 = arith.constant 0 : index
    %c1_34 = arith.constant 1 : index
    %c1_35 = arith.constant 1 : index
    %c0_36 = arith.constant 0 : index
    %29 = vector.load %arg2[%c0_33, %c1_34, %c1_35, %c0_36] : memref<1x18x18x128xf32, #tpu.memory_space<vmem>>, vector<1x16x16x128xf32>
    %30 = vector.shape_cast %29 : vector<1x16x16x128xf32> to vector<16x16x128xf32>
    %31 = vector.shape_cast %30 : vector<16x16x128xf32> to vector<256x128xf32>
    %c1_37 = arith.constant 1 : index
    %c1_38 = arith.constant 1 : index
    %c0_39 = arith.constant 0 : index
    %c0_40 = arith.constant 0 : index
    %32 = vector.load %arg3[%c1_37, %c1_38, %c0_39, %c0_40] : memref<3x3x128x128xf32, #tpu.memory_space<vmem>>, vector<1x1x128x128xf32>
    %33 = vector.shape_cast %32 : vector<1x1x128x128xf32> to vector<128x128xf32>
    %cst_41 = arith.constant dense<0.000000e+00> : vector<256x128xf32>
    %34 = tpu.matmul %31, %33, %cst_41 {dimension_numbers = #tpu.dot_dimension_numbers<[1], [0], [0], [1], [0, 0, 1, 1], [], []>} : vector<256x128xf32>, vector<128x128xf32>, vector<256x128xf32> -> vector<256x128xf32>
    %35 = arith.addf %28, %34 : vector<256x128xf32>
    %c0_42 = arith.constant 0 : index
    %c1_43 = arith.constant 1 : index
    %c2_44 = arith.constant 2 : index
    %c0_45 = arith.constant 0 : index
    %36 = vector.load %arg2[%c0_42, %c1_43, %c2_44, %c0_45] : memref<1x18x18x128xf32, #tpu.memory_space<vmem>>, vector<1x16x16x128xf32>
    %37 = vector.shape_cast %36 : vector<1x16x16x128xf32> to vector<16x16x128xf32>
    %38 = vector.shape_cast %37 : vector<16x16x128xf32> to vector<256x128xf32>
    %c1_46 = arith.constant 1 : index
    %c2_47 = arith.constant 2 : index
    %c0_48 = arith.constant 0 : index
    %c0_49 = arith.constant 0 : index
    %39 = vector.load %arg3[%c1_46, %c2_47, %c0_48, %c0_49] : memref<3x3x128x128xf32, #tpu.memory_space<vmem>>, vector<1x1x128x128xf32>
    %40 = vector.shape_cast %39 : vector<1x1x128x128xf32> to vector<128x128xf32>
    %cst_50 = arith.constant dense<0.000000e+00> : vector<256x128xf32>
    %41 = tpu.matmul %38, %40, %cst_50 {dimension_numbers = #tpu.dot_dimension_numbers<[1], [0], [0], [1], [0, 0, 1, 1], [], []>} : vector<256x128xf32>, vector<128x128xf32>, vector<256x128xf32> -> vector<256x128xf32>
    %42 = arith.addf %35, %41 : vector<256x128xf32>
    %c0_51 = arith.constant 0 : index
    %c2_52 = arith.constant 2 : index
    %c0_53 = arith.constant 0 : index
    %c0_54 = arith.constant 0 : index
    %43 = vector.load %arg2[%c0_51, %c2_52, %c0_53, %c0_54] : memref<1x18x18x128xf32, #tpu.memory_space<vmem>>, vector<1x16x16x128xf32>
    %44 = vector.shape_cast %43 : vector<1x16x16x128xf32> to vector<16x16x128xf32>
    %45 = vector.shape_cast %44 : vector<16x16x128xf32> to vector<256x128xf32>
    %c2_55 = arith.constant 2 : index
    %c0_56 = arith.constant 0 : index
    %c0_57 = arith.constant 0 : index
    %c0_58 = arith.constant 0 : index
    %46 = vector.load %arg3[%c2_55, %c0_56, %c0_57, %c0_58] : memref<3x3x128x128xf32, #tpu.memory_space<vmem>>, vector<1x1x128x128xf32>
    %47 = vector.shape_cast %46 : vector<1x1x128x128xf32> to vector<128x128xf32>
    %cst_59 = arith.constant dense<0.000000e+00> : vector<256x128xf32>
    %48 = tpu.matmul %45, %47, %cst_59 {dimension_numbers = #tpu.dot_dimension_numbers<[1], [0], [0], [1], [0, 0, 1, 1], [], []>} : vector<256x128xf32>, vector<128x128xf32>, vector<256x128xf32> -> vector<256x128xf32>
    %49 = arith.addf %42, %48 : vector<256x128xf32>
    %c0_60 = arith.constant 0 : index
    %c2_61 = arith.constant 2 : index
    %c1_62 = arith.constant 1 : index
    %c0_63 = arith.constant 0 : index
    %50 = vector.load %arg2[%c0_60, %c2_61, %c1_62, %c0_63] : memref<1x18x18x128xf32, #tpu.memory_space<vmem>>, vector<1x16x16x128xf32>
    %51 = vector.shape_cast %50 : vector<1x16x16x128xf32> to vector<16x16x128xf32>
    %52 = vector.shape_cast %51 : vector<16x16x128xf32> to vector<256x128xf32>
    %c2_64 = arith.constant 2 : index
    %c1_65 = arith.constant 1 : index
    %c0_66 = arith.constant 0 : index
    %c0_67 = arith.constant 0 : index
    %53 = vector.load %arg3[%c2_64, %c1_65, %c0_66, %c0_67] : memref<3x3x128x128xf32, #tpu.memory_space<vmem>>, vector<1x1x128x128xf32>
    %54 = vector.shape_cast %53 : vector<1x1x128x128xf32> to vector<128x128xf32>
    %cst_68 = arith.constant dense<0.000000e+00> : vector<256x128xf32>
    %55 = tpu.matmul %52, %54, %cst_68 {dimension_numbers = #tpu.dot_dimension_numbers<[1], [0], [0], [1], [0, 0, 1, 1], [], []>} : vector<256x128xf32>, vector<128x128xf32>, vector<256x128xf32> -> vector<256x128xf32>
    %56 = arith.addf %49, %55 : vector<256x128xf32>
    %c0_69 = arith.constant 0 : index
    %c2_70 = arith.constant 2 : index
    %c2_71 = arith.constant 2 : index
    %c0_72 = arith.constant 0 : index
    %57 = vector.load %arg2[%c0_69, %c2_70, %c2_71, %c0_72] : memref<1x18x18x128xf32, #tpu.memory_space<vmem>>, vector<1x16x16x128xf32>
    %58 = vector.shape_cast %57 : vector<1x16x16x128xf32> to vector<16x16x128xf32>
    %59 = vector.shape_cast %58 : vector<16x16x128xf32> to vector<256x128xf32>
    %c2_73 = arith.constant 2 : index
    %c2_74 = arith.constant 2 : index
    %c0_75 = arith.constant 0 : index
    %c0_76 = arith.constant 0 : index
    %60 = vector.load %arg3[%c2_73, %c2_74, %c0_75, %c0_76] : memref<3x3x128x128xf32, #tpu.memory_space<vmem>>, vector<1x1x128x128xf32>
    %61 = vector.shape_cast %60 : vector<1x1x128x128xf32> to vector<128x128xf32>
    %cst_77 = arith.constant dense<0.000000e+00> : vector<256x128xf32>
    %62 = tpu.matmul %59, %61, %cst_77 {dimension_numbers = #tpu.dot_dimension_numbers<[1], [0], [0], [1], [0, 0, 1, 1], [], []>} : vector<256x128xf32>, vector<128x128xf32>, vector<256x128xf32> -> vector<256x128xf32>
    %63 = arith.addf %56, %62 : vector<256x128xf32>
    %c0_78 = arith.constant 0 : index
    %c0_79 = arith.constant 0 : index
    %64 = vector.load %arg4[%c0_78, %c0_79] : memref<1x128xf32, #tpu.memory_space<vmem>>, vector<1x128xf32>
    %65 = vector.broadcast %64 : vector<1x128xf32> to vector<256x128xf32>
    %66 = arith.mulf %63, %65 : vector<256x128xf32>
    %c0_80 = arith.constant 0 : index
    %c0_81 = arith.constant 0 : index
    %67 = vector.load %arg5[%c0_80, %c0_81] : memref<1x128xf32, #tpu.memory_space<vmem>>, vector<1x128xf32>
    %68 = vector.broadcast %67 : vector<1x128xf32> to vector<256x128xf32>
    %69 = arith.addf %66, %68 : vector<256x128xf32>
    %cst_82 = arith.constant 0.000000e+00 : f32
    %70 = vector.broadcast %cst_82 : f32 to vector<256x128xf32>
    %71 = arith.maximumf %69, %70 : vector<256x128xf32>
    %72 = vector.shape_cast %71 : vector<256x128xf32> to vector<1x16x16x128xf32>
    %c0_83 = arith.constant 0 : index
    %c0_84 = arith.constant 0 : index
    %c0_85 = arith.constant 0 : index
    %c0_86 = arith.constant 0 : index
    %73 = vector.load %arg6[%c0_83, %c0_84, %c0_85, %c0_86] : memref<1x16x16x128xf32, #tpu.memory_space<vmem>>, vector<1x16x16x128xf32>
    tpu.vector_store %arg6[%c0_83, %c0_84, %c0_85, %c0_86], %72 {strides = array<i32>} : memref<1x16x16x128xf32, #tpu.memory_space<vmem>>, vector<1x16x16x128xf32>,
    return
  }
  func.func @transform_0(%arg0: i32, %arg1: i32) -> (i32, i32, i32, i32) {
    %c0_i32 = arith.constant 0 : i32
    %c0_i32_0 = arith.constant 0 : i32
    %c0_i32_1 = arith.constant 0 : i32
    %c0_i32_2 = arith.constant 0 : i32
    return %arg0, %c0_i32, %c0_i32_0, %c0_i32_1 : i32, i32, i32, i32
  }
  func.func @transform_1(%arg0: i32, %arg1: i32) -> (i32, i32, i32, i32) {
    %c0_i32 = arith.constant 0 : i32
    %c0_i32_0 = arith.constant 0 : i32
    %c0_i32_1 = arith.constant 0 : i32
    %c0_i32_2 = arith.constant 0 : i32
    return %c0_i32, %c0_i32_0, %c0_i32_1, %arg1 : i32, i32, i32, i32
  }
  func.func @transform_2(%arg0: i32, %arg1: i32) -> (i32, i32) {
    %c0_i32 = arith.constant 0 : i32
    %c0_i32_0 = arith.constant 0 : i32
    return %c0_i32, %arg1 : i32, i32
  }
  func.func @transform_3(%arg0: i32, %arg1: i32) -> (i32, i32) {
    %c0_i32 = arith.constant 0 : i32
    %c0_i32_0 = arith.constant 0 : i32
    return %c0_i32, %arg1 : i32, i32
  }
  func.func @transform_4(%arg0: i32, %arg1: i32) -> (i32, i32, i32, i32) {
    %c0_i32 = arith.constant 0 : i32
    %c0_i32_0 = arith.constant 0 : i32
    %c0_i32_1 = arith.constant 0 : i32
    return %arg0, %c0_i32, %c0_i32_0, %arg1 : i32, i32, i32, i32
  }
}

</mosaic_0001>

<llo_original>
// kernel: tpu_custom_call.1
$region0: #{tpu_custom_call.1}
  #allocation0 [shape = 'u32[]', space=smem, size = 0x4, offset = 0x4, fixed_abs, tag = 'smem constant byte address 0x4 - core index']
  #allocation1 [shape = 'u32[72,128]{1,0:T(1,128)}', space=vmem, size = 0x9000, scoped, tag = 'internal scratch']
  %s0 = inlined_call_operand.vmem [shape: f32[2,18,18,128], index: 0, kind: input, shape index: {}]
  %s1 = inlined_call_operand.vmem [shape: f32[3,3,128,128], index: 1, kind: input, shape index: {}]
  %s2 = inlined_call_operand.vmem [shape: f32[1,128], index: 2, kind: input, shape index: {}]
  %s3 = inlined_call_operand.vmem [shape: f32[1,128], index: 3, kind: input, shape index: {}]
  %s4 = inlined_call_operand.hbm [shape: f32[2,16,16,128], index: 4, kind: output, shape index: {}]
  %s5 = sld [smem:[#allocation0]]
  $region49: #{tpu_custom_call.1} parent=0
    _
  %s7 = ssub.s32 1, %s5
  %s8 = scalar_select 0, %s7, %s5
  $region1: #{tpu_custom_call.1} parent=0
    #allocation2 [shape = 'u8[262144]{0}', space=vmem, size = 0x40000, scoped, tag = 'output window, operand 0']
    #allocation3 [shape = 's32[2]{0}', space=sflag, size = 0x8, scoped, tag = 'scoped memory for tpu_custom_call.1']
    %9 = vsyncpa [#allocation3], 0
    %s10 = scalar_lea.sflag [#allocation3], 1
    %11 = vsyncpa %s10, 0
    loop: start=0, step=1, limit=4
    $region2: #{tpu_custom_call.1} parent=1 // loop_pre_header
      _
    $region3: #{tpu_custom_call.1} parent=1 // loop_header
      %s13 = sphi 0, %s17
      %p14 = scmp.ge.s32.totalorder %s13, 4
      %s20 = sphi 0, %s32
      %s21 = sphi 0, %s28
      %s22 = sphi 0, %s20
      %s23 = sphi 0, %s21
      %s24 = sphi 0, %s22
      %s25 = sphi 0, %s23
      %s35 = sphi 0, %s37
      %s38 = sphi 0, %s35
      %s39 = sphi 0, %s38
      %s55 = sphi 0, %s39
      %s61 = sphi 0, %s63
      %s64 = sphi 0, %s61
      %s65 = sphi 0, %s64
      %s81 = sphi 0, %s65
      %s87 = sphi 0, %s89
      %s90 = sphi 0, %s87
      %s91 = sphi 0, %s90
      %s107 = sphi 0, %s91
      %s113 = sphi 0, %s115
      %s116 = sphi 0, %s113
      %s117 = sphi 0, %s116
      %s133 = sphi 0, %s117
      %s141 = sphi 0, %s143
      %s144 = sphi 0, %s141
      %s145 = sphi 0, %s144
      %s161 = sphi 0, %s145
    $region4: #{tpu_custom_call.1} parent=1 // loop_header_branch
      %16 = sbr.rel (%p14) target = $region8
    $region5: #{tpu_custom_call.1} parent=1 // loop_body
      %s18 = ssub.s32 %s13, 1
      %s19 = ssub.s32 %s13, 2
      %s26 = sadd.s32 1, %s21
      %p27 = scmp.ge.s32.totalorder %s26, 1
      %s28 = scalar_select %p27, 0, %s26
      %s29 = sadd.s32 1, %s20
      %s30 = scalar_select %p27, %s29, %s20
      %p31 = scmp.ge.s32.totalorder %s30, 2
      %s32 = scalar_select %p31, 0, %s30
      %s33 = ssub.s32 %s20, %s32
      %p34 = scmp.eq.s32.totalorder %s33, 0
      %s36 = sadd.s32 %s35, 1
      %s37 = scalar_select %p34, %s35, %s36
      %p40 = pneg %p34
      %p41 = scmp.eq.s32.totalorder %s13, 1
      %p42 = por %p40, %p41
      %p43 = scmp.ne.s32.totalorder %s35, %s38
      %p44 = scmp.eq.s32.totalorder %s13, 0
      %p45 = por %p43, %p44
      %p46 = scmp.ne.s32.totalorder %s35, %s38
      %p47 = scmp.eq.s32.totalorder %s18, 1
      %p48 = por %p46, %p47
      %p49 = scmp.ne.s32.totalorder %s38, %s39
      %p50 = scmp.eq.s32.totalorder %s18, 0
      %p51 = por %p49, %p50
      %p52 = scmp.ne.s32.totalorder %s38, %s39
      %p53 = scmp.eq.s32.totalorder %s19, 1
      %p54 = por %p52, %p53
      %p56 = scmp.ne.s32.totalorder %s39, %s55
      %p57 = scmp.eq.s32.totalorder %s19, 0
      %p58 = por %p56, %p57
      %s59 = ssub.s32 %s21, %s28
      %p60 = scmp.eq.s32.totalorder %s59, 0
      %s62 = sadd.s32 %s61, 1
      %s63 = scalar_select %p60, %s61, %s62
      %p66 = pneg %p60
      %p67 = scmp.eq.s32.totalorder %s13, 1
      %p68 = por %p66, %p67
      %p69 = scmp.ne.s32.totalorder %s61, %s64
      %p70 = scmp.eq.s32.totalorder %s13, 0
      %p71 = por %p69, %p70
      %p72 = scmp.ne.s32.totalorder %s61, %s64
      %p73 = scmp.eq.s32.totalorder %s18, 1
      %p74 = por %p72, %p73
      %p75 = scmp.ne.s32.totalorder %s64, %s65
      %p76 = scmp.eq.s32.totalorder %s18, 0
      %p77 = por %p75, %p76
      %p78 = scmp.ne.s32.totalorder %s64, %s65
      %p79 = scmp.eq.s32.totalorder %s19, 1
      %p80 = por %p78, %p79
      %p82 = scmp.ne.s32.totalorder %s65, %s81
      %p83 = scmp.eq.s32.totalorder %s19, 0
      %p84 = por %p82, %p83
      %s85 = ssub.s32 %s21, %s28
      %p86 = scmp.eq.s32.totalorder %s85, 0
      %s88 = sadd.s32 %s87, 1
      %s89 = scalar_select %p86, %s87, %s88
      %p92 = pneg %p86
      %p93 = scmp.eq.s32.totalorder %s13, 1
      %p94 = por %p92, %p93
      %p95 = scmp.ne.s32.totalorder %s87, %s90
      %p96 = scmp.eq.s32.totalorder %s13, 0
      %p97 = por %p95, %p96
      %p98 = scmp.ne.s32.totalorder %s87, %s90
      %p99 = scmp.eq.s32.totalorder %s18, 1
      %p100 = por %p98, %p99
      %p101 = scmp.ne.s32.totalorder %s90, %s91
      %p102 = scmp.eq.s32.totalorder %s18, 0
      %p103 = por %p101, %p102
      %p104 = scmp.ne.s32.totalorder %s90, %s91
      %p105 = scmp.eq.s32.totalorder %s19, 1
      %p106 = por %p104, %p105
      %p108 = scmp.ne.s32.totalorder %s91, %s107
      %p109 = scmp.eq.s32.totalorder %s19, 0
      %p110 = por %p108, %p109
      %s111 = ssub.s32 %s21, %s28
      %p112 = scmp.eq.s32.totalorder %s111, 0
      %s114 = sadd.s32 %s113, 1
      %s115 = scalar_select %p112, %s113, %s114
      %p118 = pneg %p112
      %p119 = scmp.eq.s32.totalorder %s13, 1
      %p120 = por %p118, %p119
      %p121 = scmp.ne.s32.totalorder %s113, %s116
      %p122 = scmp.eq.s32.totalorder %s13, 0
      %p123 = por %p121, %p122
      %p124 = scmp.ne.s32.totalorder %s113, %s116
      %p125 = scmp.eq.s32.totalorder %s18, 1
      %p126 = por %p124, %p125
      %p127 = scmp.ne.s32.totalorder %s116, %s117
      %p128 = scmp.eq.s32.totalorder %s18, 0
      %p129 = por %p127, %p128
      %p130 = scmp.ne.s32.totalorder %s116, %s117
      %p131 = scmp.eq.s32.totalorder %s19, 1
      %p132 = por %p130, %p131
      %p134 = scmp.ne.s32.totalorder %s117, %s133
      %p135 = scmp.eq.s32.totalorder %s19, 0
      %p136 = por %p134, %p135
      %s137 = ssub.s32 %s20, %s32
      %s138 = ssub.s32 %s21, %s28
      %s139 = sor.u32 %s137, %s138
      %p140 = scmp.eq.s32.totalorder %s139, 0
      %s142 = sadd.s32 %s141, 1
      %s143 = scalar_select %p140, %s141, %s142
      %p146 = pneg %p140
      %p147 = scmp.eq.s32.totalorder %s13, 1
      %p148 = por %p146, %p147
      %p149 = scmp.ne.s32.totalorder %s141, %s144
      %p150 = scmp.eq.s32.totalorder %s13, 0
      %p151 = por %p149, %p150
      %p152 = scmp.ne.s32.totalorder %s141, %s144
      %p153 = scmp.eq.s32.totalorder %s18, 1
      %p154 = por %p152, %p153
      %p155 = scmp.ne.s32.totalorder %s144, %s145
      %p156 = scmp.eq.s32.totalorder %s18, 0
      %p157 = por %p155, %p156
      %p158 = scmp.ne.s32.totalorder %s144, %s145
      %p159 = scmp.eq.s32.totalorder %s19, 1
      %p160 = por %p158, %p159
      %p162 = scmp.ne.s32.totalorder %s145, %s161
      %p163 = scmp.eq.s32.totalorder %s19, 0
      %p164 = por %p162, %p163
      %p165 = scmp.le.s32.totalorder 1, %s13
      %p166 = scmp.lt.s32.totalorder %s13, 3
      %p167 = pnand %p165, %p166
      %p168 = pneg %p167
      // Predicated region
      $region9: #{tpu_custom_call.1} parent=5 // pred_check
        _
      $region10: #{tpu_custom_call.1} parent=5 // pred_check_branch
        %170 = sbr.rel (%p167) target = $region12
      $region11: #{tpu_custom_call.1} parent=5 // pred_region
        %s171 = ssub.s32 %s13, 1
        // Predicated region
        $region13: #{tpu_custom_call.1} parent=11 // pred_check
          %p172 = pneg %p77
        $region14: #{tpu_custom_call.1} parent=11 // pred_check_branch
          %174 = sbr.rel (%p172) target = $region16
        $region15: #{tpu_custom_call.1} parent=11 // pred_region
          %p175 = scmp.lt.s32.totalorder %s23, 0
          %s176 = scalar_select %p175, %s23, 0
          %s177 = smul.addr %s176, 8
          %s178 = scalar_lea.vmem %s1, %s177
        $region16: #{tpu_custom_call.1} parent=11 // pred_fallthru
          _
        // Predicated region
        $region17: #{tpu_custom_call.1} parent=11 // pred_check
          %p179 = pneg %p103
        $region18: #{tpu_custom_call.1} parent=11 // pred_check_branch
          %181 = sbr.rel (%p179) target = $region20
        $region19: #{tpu_custom_call.1} parent=11 // pred_region
          %p182 = scmp.lt.s32.totalorder %s23, 0
          %s183 = scalar_select %p182, %s23, 0
          %s184 = scalar_lea.vmem %s2, %s183
        $region20: #{tpu_custom_call.1} parent=11 // pred_fallthru
          _
        // Predicated region
        $region21: #{tpu_custom_call.1} parent=11 // pred_check
          %p185 = pneg %p129
        $region22: #{tpu_custom_call.1} parent=11 // pred_check_branch
          %187 = sbr.rel (%p185) target = $region24
        $region23: #{tpu_custom_call.1} parent=11 // pred_region
          %p188 = scmp.lt.s32.totalorder %s23, 0
          %s189 = scalar_select %p188, %s23, 0
          %s190 = scalar_lea.vmem %s3, %s189
        $region24: #{tpu_custom_call.1} parent=11 // pred_fallthru
          _
      $region12: #{tpu_custom_call.1} parent=5 // pred_fallthru
        _
      %p191 = scmp.lt.s32.totalorder %s13, 2
      // Predicated region
      $region25: #{tpu_custom_call.1} parent=5 // pred_check
        %p192 = pneg %p191
      $region26: #{tpu_custom_call.1} parent=5 // pred_check_branch
        %194 = sbr.rel (%p192) target = $region28
      $region27: #{tpu_custom_call.1} parent=5 // pred_region
        // Predicated region
        $region29: #{tpu_custom_call.1} parent=27 // pred_check
          %p195 = pneg %p45
        $region30: #{tpu_custom_call.1} parent=27 // pred_check_branch
          %197 = sbr.rel (%p195) target = $region32
        $region31: #{tpu_custom_call.1} parent=27 // pred_region
          %p198 = scmp.lt.s32.totalorder %s20, 1
          %s199 = scalar_select %p198, %s20, 1
          %s200 = smul.addr %s199, 54
          %s201 = smul.addr %s200, 8
          %s202 = scalar_lea.vmem %s0, %s201
        $region32: #{tpu_custom_call.1} parent=27 // pred_fallthru
          _
      $region28: #{tpu_custom_call.1} parent=5 // pred_fallthru
        _
      %p203 = scmp.le.s32.totalorder 1, %s13
      %p204 = scmp.lt.s32.totalorder %s13, 3
      %p205 = pnand %p203, %p204
      %p206 = pneg %p205
      // Predicated region
      $region33: #{tpu_custom_call.1} parent=5 // pred_check
        _
      $region34: #{tpu_custom_call.1} parent=5 // pred_check_branch
        %208 = sbr.rel (%p205) target = $region36
      $region35: #{tpu_custom_call.1} parent=5 // pred_region
        %s209 = ssub.s32 %s13, 1
        %p210 = scmp.lt.s32.totalorder %s22, 1
        %s211 = scalar_select %p210, %s22, 1
        %s212 = smul.addr %s211, 54
        %s213 = smul.addr %s212, 8
        %s214 = scalar_lea.vmem %s0, %s213
        %p215 = pneg %p51
        %p216 = pneg %p48
        %p217 = scmp.lt.s32.totalorder %s23, 0
        %s218 = scalar_select %p217, %s23, 0
        %s219 = smul.addr %s218, 8
        %s220 = scalar_lea.vmem %s1, %s219
        %p221 = pneg %p77
        %p222 = pneg %p74
        %p223 = scmp.lt.s32.totalorder %s23, 0
        %s224 = scalar_select %p223, %s23, 0
        %s225 = scalar_lea.vmem %s2, %s224
        %p226 = pneg %p103
        %p227 = pneg %p100
        %p228 = scmp.lt.s32.totalorder %s23, 0
        %s229 = scalar_select %p228, %s23, 0
        %s230 = scalar_lea.vmem %s3, %s229
        %p231 = pneg %p129
        %p232 = pneg %p126
        %p233 = pneg %p157
        %p234 = pneg %p154
        %s235 = sand.u32 %s144, 1
        %s236 = scalar_lea.sflag [#allocation3], %s235
        %s237 = sand.u32 %s144, 1
        %s238 = smul.addr %s237, 256
        %s239 = scalar_lea.vmem [#allocation2], %s238
        %p240 = scmp.lt.s32.totalorder %s22, 1
        %s241 = scalar_select %p240, %s22, 1
        %s242 = smul.addr %s241, 54
        %s243 = smul.addr %s242, 8
        %s244 = scalar_lea.vmem %s0, %s243
        %p245 = scmp.lt.s32.totalorder %s23, 0
        %s246 = scalar_select %p245, %s23, 0
        %s247 = smul.addr %s246, 8
        %s248 = scalar_lea.vmem %s1, %s247
        %p249 = scmp.lt.s32.totalorder %s23, 0
        %s250 = scalar_select %p249, %s23, 0
        %s251 = scalar_lea.vmem %s2, %s250
        %p252 = scmp.lt.s32.totalorder %s23, 0
        %s253 = scalar_select %p252, %s23, 0
        %s254 = scalar_lea.vmem %s3, %s253
        %v255 = vld [vmem:[%s244] sm:$0xff]
        %v256 = vld [vmem:[%s244 + $0x8] sm:$0xff]
        %v257 = vld [vmem:[%s244 + $0x18] sm:$0xff]
        %v258 = vld [vmem:[%s244 + $0x20] sm:$0xff]
        %v259 = vld [vmem:[%s244 + $0x30] sm:$0xff]
        %v260 = vld [vmem:[%s244 + $0x38] sm:$0xff]
        %v261 = vld [vmem:[%s244 + $0x48] sm:$0xff]
        %v262 = vld [vmem:[%s244 + $0x50] sm:$0xff]
        %v263 = vld [vmem:[%s244 + $0x60] sm:$0xff]
        %v264 = vld [vmem:[%s244 + $0x68] sm:$0xff]
        %v265 = vld [vmem:[%s244 + $0x78] sm:$0xff]
        %v266 = vld [vmem:[%s244 + $0x80] sm:$0xff]
        %v267 = vld [vmem:[%s244 + $0x90] sm:$0xff]
        %v268 = vld [vmem:[%s244 + $0x98] sm:$0xff]
        %v269 = vld [vmem:[%s244 + $0xa8] sm:$0xff]
        %v270 = vld [vmem:[%s244 + $0xb0] sm:$0xff]
        %v271 = vld [vmem:[%s244 + $0xc0] sm:$0xff]
        %v272 = vld [vmem:[%s244 + $0xc8] sm:$0xff]
        %v273 = vld [vmem:[%s244 + $0xd8] sm:$0xff]
        %v274 = vld [vmem:[%s244 + $0xe0] sm:$0xff]
        %v275 = vld [vmem:[%s244 + $0xf0] sm:$0xff]
        %v276 = vld [vmem:[%s244 + $0xf8] sm:$0xff]
        %v277 = vld [vmem:[%s244 + $0x108] sm:$0xff]
        %v278 = vld [vmem:[%s244 + $0x110] sm:$0xff]
        %v279 = vld [vmem:[%s244 + $0x120] sm:$0xff]
        %v280 = vld [vmem:[%s244 + $0x128] sm:$0xff]
        %v281 = vld [vmem:[%s244 + $0x138] sm:$0xff]
        %v282 = vld [vmem:[%s244 + $0x140] sm:$0xff]
        %v283 = vld [vmem:[%s244 + $0x150] sm:$0xff]
        %v284 = vld [vmem:[%s244 + $0x158] sm:$0xff]
        %v285 = vld [vmem:[%s244 + $0x168] sm:$0xff]
        %v286 = vld [vmem:[%s244 + $0x170] sm:$0xff]
        %v287 = vld [vmem:[%s248] sm:$0xff]
        %v288 = vld [vmem:[%s248 + $0x8] sm:$0xff]
        %v289 = vld [vmem:[%s248 + $0x10] sm:$0xff]
        %v290 = vld [vmem:[%s248 + $0x18] sm:$0xff]
        %v291 = vld [vmem:[%s248 + $0x20] sm:$0xff]
        %v292 = vld [vmem:[%s248 + $0x28] sm:$0xff]
        %v293 = vld [vmem:[%s248 + $0x30] sm:$0xff]
        %v294 = vld [vmem:[%s248 + $0x38] sm:$0xff]
        %v295 = vld [vmem:[%s248 + $0x40] sm:$0xff]
        %v296 = vld [vmem:[%s248 + $0x48] sm:$0xff]
        %v297 = vld [vmem:[%s248 + $0x50] sm:$0xff]
        %v298 = vld [vmem:[%s248 + $0x58] sm:$0xff]
        %v299 = vld [vmem:[%s248 + $0x60] sm:$0xff]
        %v300 = vld [vmem:[%s248 + $0x68] sm:$0xff]
        %v301 = vld [vmem:[%s248 + $0x70] sm:$0xff]
        %v302 = vld [vmem:[%s248 + $0x78] sm:$0xff]
        %v303 = vld [vmem:[%s244 + $0x1] sm:$0xff]
        %v304 = vld [vmem:[%s244 + $0x9] sm:$0xff]
        %v305 = vld [vmem:[%s244 + $0x19] sm:$0xff]
        %v306 = vld [vmem:[%s244 + $0x21] sm:$0xff]
        %v307 = vld [vmem:[%s244 + $0x31] sm:$0xff]
        %v308 = vld [vmem:[%s244 + $0x39] sm:$0xff]
        %v309 = vld [vmem:[%s244 + $0x49] sm:$0xff]
        %v310 = vld [vmem:[%s244 + $0x51] sm:$0xff]
        %v311 = vld [vmem:[%s244 + $0x61] sm:$0xff]
        %v312 = vld [vmem:[%s244 + $0x69] sm:$0xff]
        %v313 = vld [vmem:[%s244 + $0x79] sm:$0xff]
        %v314 = vld [vmem:[%s244 + $0x81] sm:$0xff]
        %v315 = vld [vmem:[%s244 + $0x91] sm:$0xff]
        %v316 = vld [vmem:[%s244 + $0x99] sm:$0xff]
        %v317 = vld [vmem:[%s244 + $0xa9] sm:$0xff]
        %v318 = vld [vmem:[%s244 + $0xb1] sm:$0xff]
        %v319 = vld [vmem:[%s244 + $0xc1] sm:$0xff]
        %v320 = vld [vmem:[%s244 + $0xc9] sm:$0xff]
        %v321 = vld [vmem:[%s244 + $0xd9] sm:$0xff]
        %v322 = vld [vmem:[%s244 + $0xe1] sm:$0xff]
        %v323 = vld [vmem:[%s244 + $0xf1] sm:$0xff]
        %v324 = vld [vmem:[%s244 + $0xf9] sm:$0xff]
        %v325 = vld [vmem:[%s244 + $0x109] sm:$0xff]
        %v326 = vld [vmem:[%s244 + $0x111] sm:$0xff]
        %v327 = vld [vmem:[%s244 + $0x121] sm:$0xff]
        %v328 = vld [vmem:[%s244 + $0x129] sm:$0xff]
        %v329 = vld [vmem:[%s244 + $0x139] sm:$0xff]
        %v330 = vld [vmem:[%s244 + $0x141] sm:$0xff]
        %v331 = vld [vmem:[%s244 + $0x151] sm:$0xff]
        %v332 = vld [vmem:[%s244 + $0x159] sm:$0xff]
        %v333 = vld [vmem:[%s244 + $0x169] sm:$0xff]
        %v334 = vld [vmem:[%s244 + $0x171] sm:$0xff]
        %s335 = scalar_lea.vmem %s248, 128
        %v336 = vld [vmem:[%s335] sm:$0xff]
        %v337 = vld [vmem:[%s335 + $0x8] sm:$0xff]
        %v338 = vld [vmem:[%s335 + $0x10] sm:$0xff]
        %v339 = vld [vmem:[%s335 + $0x18] sm:$0xff]
        %v340 = vld [vmem:[%s335 + $0x20] sm:$0xff]
        %v341 = vld [vmem:[%s335 + $0x28] sm:$0xff]
        %v342 = vld [vmem:[%s335 + $0x30] sm:$0xff]
        %v343 = vld [vmem:[%s335 + $0x38] sm:$0xff]
        %v344 = vld [vmem:[%s335 + $0x40] sm:$0xff]
        %v345 = vld [vmem:[%s335 + $0x48] sm:$0xff]
        %v346 = vld [vmem:[%s335 + $0x50] sm:$0xff]
        %v347 = vld [vmem:[%s335 + $0x58] sm:$0xff]
        %v348 = vld [vmem:[%s335 + $0x60] sm:$0xff]
        %v349 = vld [vmem:[%s335 + $0x68] sm:$0xff]
        %v350 = vld [vmem:[%s335 + $0x70] sm:$0xff]
        %v351 = vld [vmem:[%s335 + $0x78] sm:$0xff]
        %352 = vmatpush.msra.mxu0 %v351
        %353 = vmatpush.msra.mxu0 %v350
        %354 = vmatpush.msra.mxu0 %v349
        %355 = vmatpush.msra.mxu0 %v348
        %356 = vmatpush.msra.mxu0 %v347
        %357 = vmatpush.msra.mxu0 %v346
        %358 = vmatpush.msra.mxu0 %v345
        %359 = vmatpush.msra.mxu0 %v344
        %360 = vmatpush.msra.mxu0 %v343
        %361 = vmatpush.msra.mxu0 %v342
        %362 = vmatpush.msra.mxu0 %v341
        %363 = vmatpush.msra.mxu0 %v340
        %364 = vmatpush.msra.mxu0 %v339
        %365 = vmatpush.msra.mxu0 %v338
        %366 = vmatpush.msra.mxu0 %v337
        %367 = vmatpush.msra.mxu0 %v336
        %368 = vmatmul.f32.gmra.mxu0 %v303
        %v369 = vpop.f32.mrf.mxu0
        %v370 = vadd.f32 0.0, %v369
        %371 = vmatmul.f32.gmra.mxu0 %v304
        %v372 = vpop.f32.mrf.mxu0
        %v373 = vadd.f32 0.0, %v372
        %374 = vmatmul.f32.gmra.mxu0 %v305
        %v375 = vpop.f32.mrf.mxu0
        %v376 = vadd.f32 0.0, %v375
        %377 = vmatmul.f32.gmra.mxu0 %v306
        %v378 = vpop.f32.mrf.mxu0
        %v379 = vadd.f32 0.0, %v378
        %380 = vmatmul.f32.gmra.mxu0 %v307
        %v381 = vpop.f32.mrf.mxu0
        %v382 = vadd.f32 0.0, %v381
        %383 = vmatmul.f32.gmra.mxu0 %v308
        %v384 = vpop.f32.mrf.mxu0
        %v385 = vadd.f32 0.0, %v384
        %386 = vmatmul.f32.gmra.mxu0 %v309
        %v387 = vpop.f32.mrf.mxu0
        %v388 = vadd.f32 0.0, %v387
        %389 = vmatmul.f32.gmra.mxu0 %v310
        %v390 = vpop.f32.mrf.mxu0
        %v391 = vadd.f32 0.0, %v390
        %392 = vmatmul.f32.gmra.mxu0 %v311
        %v393 = vpop.f32.mrf.mxu0
        %v394 = vadd.f32 0.0, %v393
        %395 = vmatmul.f32.gmra.mxu0 %v312
        %v396 = vpop.f32.mrf.mxu0
        %v397 = vadd.f32 0.0, %v396
        %398 = vmatmul.f32.gmra.mxu0 %v313
        %v399 = vpop.f32.mrf.mxu0
        %v400 = vadd.f32 0.0, %v399
        %401 = vmatmul.f32.gmra.mxu0 %v314
        %v402 = vpop.f32.mrf.mxu0
        %v403 = vadd.f32 0.0, %v402
        %404 = vmatmul.f32.gmra.mxu0 %v315
        %v405 = vpop.f32.mrf.mxu0
        %v406 = vadd.f32 0.0, %v405
        %407 = vmatmul.f32.gmra.mxu0 %v316
        %v408 = vpop.f32.mrf.mxu0
        %v409 = vadd.f32 0.0, %v408
        %410 = vmatmul.f32.gmra.mxu0 %v317
        %v411 = vpop.f32.mrf.mxu0
        %v412 = vadd.f32 0.0, %v411
        %413 = vmatmul.f32.gmra.mxu0 %v318
        %v414 = vpop.f32.mrf.mxu0
        %v415 = vadd.f32 0.0, %v414
        %416 = vmatmul.f32.gmra.mxu0 %v319
        %v417 = vpop.f32.mrf.mxu0
        %v418 = vadd.f32 0.0, %v417
        %419 = vmatmul.f32.gmra.mxu0 %v320
        %v420 = vpop.f32.mrf.mxu0
        %v421 = vadd.f32 0.0, %v420
        %422 = vmatmul.f32.gmra.mxu0 %v321
        %v423 = vpop.f32.mrf.mxu0
        %v424 = vadd.f32 0.0, %v423
        %425 = vmatmul.f32.gmra.mxu0 %v322
        %v426 = vpop.f32.mrf.mxu0
        %v427 = vadd.f32 0.0, %v426
        %428 = vmatmul.f32.gmra.mxu0 %v323
        %v429 = vpop.f32.mrf.mxu0
        %v430 = vadd.f32 0.0, %v429
        %431 = vmatmul.f32.gmra.mxu0 %v324
        %v432 = vpop.f32.mrf.mxu0
        %v433 = vadd.f32 0.0, %v432
        %434 = vmatmul.f32.gmra.mxu0 %v325
        %v435 = vpop.f32.mrf.mxu0
        %v436 = vadd.f32 0.0, %v435
        %437 = vmatmul.f32.gmra.mxu0 %v326
        %v438 = vpop.f32.mrf.mxu0
        %v439 = vadd.f32 0.0, %v438
        %440 = vmatmul.f32.gmra.mxu0 %v327
        %v441 = vpop.f32.mrf.mxu0
        %v442 = vadd.f32 0.0, %v441
        %443 = vmatmul.f32.gmra.mxu0 %v328
        %v444 = vpop.f32.mrf.mxu0
        %v445 = vadd.f32 0.0, %v444
        %446 = vmatmul.f32.gmra.mxu0 %v329
        %v447 = vpop.f32.mrf.mxu0
        %v448 = vadd.f32 0.0, %v447
        %449 = vmatmul.f32.gmra.mxu0 %v330
        %v450 = vpop.f32.mrf.mxu0
        %v451 = vadd.f32 0.0, %v450
        %452 = vmatmul.f32.gmra.mxu0 %v331
        %v453 = vpop.f32.mrf.mxu0
        %v454 = vadd.f32 0.0, %v453
        %455 = vmatmul.f32.gmra.mxu0 %v332
        %v456 = vpop.f32.mrf.mxu0
        %v457 = vadd.f32 0.0, %v456
        %458 = vmatmul.f32.gmra.mxu0 %v333
        %v459 = vpop.f32.mrf.mxu0
        %v460 = vadd.f32 0.0, %v459
        %461 = vmatmul.f32.gmra.mxu0 %v334
        %v462 = vpop.f32.mrf.mxu0
        %v463 = vadd.f32 0.0, %v462
        %464 = vdwg.mxu0
        %465 = vmatpush.msra.mxu0 %v302
        %466 = vmatpush.msra.mxu0 %v301
        %467 = vmatpush.msra.mxu0 %v300
        %468 = vmatpush.msra.mxu0 %v299
        %469 = vmatpush.msra.mxu0 %v298
        %470 = vmatpush.msra.mxu0 %v297
        %471 = vmatpush.msra.mxu0 %v296
        %472 = vmatpush.msra.mxu0 %v295
        %473 = vmatpush.msra.mxu0 %v294
        %474 = vmatpush.msra.mxu0 %v293
        %475 = vmatpush.msra.mxu0 %v292
        %476 = vmatpush.msra.mxu0 %v291
        %477 = vmatpush.msra.mxu0 %v290
        %478 = vmatpush.msra.mxu0 %v289
        %479 = vmatpush.msra.mxu0 %v288
        %480 = vmatpush.msra.mxu0 %v287
        %481 = vmatmul.f32.gmra.mxu0 %v255
        %v482 = vpop.f32.mrf.mxu0
        %v483 = vadd.f32 %v370, %v482
        %484 = vmatmul.f32.gmra.mxu0 %v256
        %v485 = vpop.f32.mrf.mxu0
        %v486 = vadd.f32 %v373, %v485
        %487 = vmatmul.f32.gmra.mxu0 %v257
        %v488 = vpop.f32.mrf.mxu0
        %v489 = vadd.f32 %v376, %v488
        %490 = vmatmul.f32.gmra.mxu0 %v258
        %v491 = vpop.f32.mrf.mxu0
        %v492 = vadd.f32 %v379, %v491
        %493 = vmatmul.f32.gmra.mxu0 %v259
        %v494 = vpop.f32.mrf.mxu0
        %v495 = vadd.f32 %v382, %v494
        %496 = vmatmul.f32.gmra.mxu0 %v260
        %v497 = vpop.f32.mrf.mxu0
        %v498 = vadd.f32 %v385, %v497
        %499 = vmatmul.f32.gmra.mxu0 %v261
        %v500 = vpop.f32.mrf.mxu0
        %v501 = vadd.f32 %v388, %v500
        %502 = vmatmul.f32.gmra.mxu0 %v262
        %v503 = vpop.f32.mrf.mxu0
        %v504 = vadd.f32 %v391, %v503
        %505 = vmatmul.f32.gmra.mxu0 %v263
        %v506 = vpop.f32.mrf.mxu0
        %v507 = vadd.f32 %v394, %v506
        %508 = vmatmul.f32.gmra.mxu0 %v264
        %v509 = vpop.f32.mrf.mxu0
        %v510 = vadd.f32 %v397, %v509
        %511 = vmatmul.f32.gmra.mxu0 %v265
        %v512 = vpop.f32.mrf.mxu0
        %v513 = vadd.f32 %v400, %v512
        %514 = vmatmul.f32.gmra.mxu0 %v266
        %v515 = vpop.f32.mrf.mxu0
        %v516 = vadd.f32 %v403, %v515
        %517 = vmatmul.f32.gmra.mxu0 %v267
        %v518 = vpop.f32.mrf.mxu0
        %v519 = vadd.f32 %v406, %v518
        %520 = vmatmul.f32.gmra.mxu0 %v268
        %v521 = vpop.f32.mrf.mxu0
        %v522 = vadd.f32 %v409, %v521
        %523 = vmatmul.f32.gmra.mxu0 %v269
        %v524 = vpop.f32.mrf.mxu0
        %v525 = vadd.f32 %v412, %v524
        %526 = vmatmul.f32.gmra.mxu0 %v270
        %v527 = vpop.f32.mrf.mxu0
        %v528 = vadd.f32 %v415, %v527
        %529 = vmatmul.f32.gmra.mxu0 %v271
        %v530 = vpop.f32.mrf.mxu0
        %v531 = vadd.f32 %v418, %v530
        %532 = vmatmul.f32.gmra.mxu0 %v272
        %v533 = vpop.f32.mrf.mxu0
        %v534 = vadd.f32 %v421, %v533
        %535 = vmatmul.f32.gmra.mxu0 %v273
        %v536 = vpop.f32.mrf.mxu0
        %v537 = vadd.f32 %v424, %v536
        %538 = vmatmul.f32.gmra.mxu0 %v274
        %v539 = vpop.f32.mrf.mxu0
        %v540 = vadd.f32 %v427, %v539
        %541 = vmatmul.f32.gmra.mxu0 %v275
        %v542 = vpop.f32.mrf.mxu0
        %v543 = vadd.f32 %v430, %v542
        %544 = vmatmul.f32.gmra.mxu0 %v276
        %v545 = vpop.f32.mrf.mxu0
        %v546 = vadd.f32 %v433, %v545
        %547 = vmatmul.f32.gmra.mxu0 %v277
        %v548 = vpop.f32.mrf.mxu0
        %v549 = vadd.f32 %v436, %v548
        %550 = vmatmul.f32.gmra.mxu0 %v278
        %v551 = vpop.f32.mrf.mxu0
        %v552 = vadd.f32 %v439, %v551
        %553 = vmatmul.f32.gmra.mxu0 %v279
        %v554 = vpop.f32.mrf.mxu0
        %v555 = vadd.f32 %v442, %v554
        %556 = vmatmul.f32.gmra.mxu0 %v280
        %v557 = vpop.f32.mrf.mxu0
        %v558 = vadd.f32 %v445, %v557
        %559 = vmatmul.f32.gmra.mxu0 %v281
        %v560 = vpop.f32.mrf.mxu0
        %v561 = vadd.f32 %v448, %v560
        %562 = vmatmul.f32.gmra.mxu0 %v282
        %v563 = vpop.f32.mrf.mxu0
        %v564 = vadd.f32 %v451, %v563
        %565 = vmatmul.f32.gmra.mxu0 %v283
        %v566 = vpop.f32.mrf.mxu0
        %v567 = vadd.f32 %v454, %v566
        %568 = vmatmul.f32.gmra.mxu0 %v284
        %v569 = vpop.f32.mrf.mxu0
        %v570 = vadd.f32 %v457, %v569
        %571 = vmatmul.f32.gmra.mxu0 %v285
        %v572 = vpop.f32.mrf.mxu0
        %v573 = vadd.f32 %v460, %v572
        %574 = vmatmul.f32.gmra.mxu0 %v286
        %v575 = vpop.f32.mrf.mxu0
        %v576 = vadd.f32 %v463, %v575
        %577 = vdwg.mxu0
        %v578 = vld [vmem:[%s244 + $0x2] sm:$0xff]
        %v579 = vld [vmem:[%s244 + $0xa] sm:$0xff]
        %v580 = vld [vmem:[%s244 + $0x1a] sm:$0xff]
        %v581 = vld [vmem:[%s244 + $0x22] sm:$0xff]
        %v582 = vld [vmem:[%s244 + $0x32] sm:$0xff]
        %v583 = vld [vmem:[%s244 + $0x3a] sm:$0xff]
        %v584 = vld [vmem:[%s244 + $0x4a] sm:$0xff]
        %v585 = vld [vmem:[%s244 + $0x52] sm:$0xff]
        %v586 = vld [vmem:[%s244 + $0x62] sm:$0xff]
        %v587 = vld [vmem:[%s244 + $0x6a] sm:$0xff]
        %v588 = vld [vmem:[%s244 + $0x7a] sm:$0xff]
        %v589 = vld [vmem:[%s244 + $0x82] sm:$0xff]
        %v590 = vld [vmem:[%s244 + $0x92] sm:$0xff]
        %v591 = vld [vmem:[%s244 + $0x9a] sm:$0xff]
        %v592 = vld [vmem:[%s244 + $0xaa] sm:$0xff]
        %v593 = vld [vmem:[%s244 + $0xb2] sm:$0xff]
        %v594 = vld [vmem:[%s244 + $0xc2] sm:$0xff]
        %v595 = vld [vmem:[%s244 + $0xca] sm:$0xff]
        %v596 = vld [vmem:[%s244 + $0xda] sm:$0xff]
        %v597 = vld [vmem:[%s244 + $0xe2] sm:$0xff]
        %v598 = vld [vmem:[%s244 + $0xf2] sm:$0xff]
        %v599 = vld [vmem:[%s244 + $0xfa] sm:$0xff]
        %v600 = vld [vmem:[%s244 + $0x10a] sm:$0xff]
        %v601 = vld [vmem:[%s244 + $0x112] sm:$0xff]
        %v602 = vld [vmem:[%s244 + $0x122] sm:$0xff]
        %v603 = vld [vmem:[%s244 + $0x12a] sm:$0xff]
        %v604 = vld [vmem:[%s244 + $0x13a] sm:$0xff]
        %v605 = vld [vmem:[%s244 + $0x142] sm:$0xff]
        %v606 = vld [vmem:[%s244 + $0x152] sm:$0xff]
        %v607 = vld [vmem:[%s244 + $0x15a] sm:$0xff]
        %v608 = vld [vmem:[%s244 + $0x16a] sm:$0xff]
        %v609 = vld [vmem:[%s244 + $0x172] sm:$0xff]
        %s610 = scalar_lea.vmem %s248, 256
        %v611 = vld [vmem:[%s610] sm:$0xff]
        %v612 = vld [vmem:[%s610 + $0x8] sm:$0xff]
        %v613 = vld [vmem:[%s610 + $0x10] sm:$0xff]
        %v614 = vld [vmem:[%s610 + $0x18] sm:$0xff]
        %v615 = vld [vmem:[%s610 + $0x20] sm:$0xff]
        %v616 = vld [vmem:[%s610 + $0x28] sm:$0xff]
        %v617 = vld [vmem:[%s610 + $0x30] sm:$0xff]
        %v618 = vld [vmem:[%s610 + $0x38] sm:$0xff]
        %v619 = vld [vmem:[%s610 + $0x40] sm:$0xff]
        %v620 = vld [vmem:[%s610 + $0x48] sm:$0xff]
        %v621 = vld [vmem:[%s610 + $0x50] sm:$0xff]
        %v622 = vld [vmem:[%s610 + $0x58] sm:$0xff]
        %v623 = vld [vmem:[%s610 + $0x60] sm:$0xff]
        %v624 = vld [vmem:[%s610 + $0x68] sm:$0xff]
        %v625 = vld [vmem:[%s610 + $0x70] sm:$0xff]
        %v626 = vld [vmem:[%s610 + $0x78] sm:$0xff]
        %627 = vmatpush.msra.mxu0 %v626
        %628 = vmatpush.msra.mxu0 %v625
        %629 = vmatpush.msra.mxu0 %v624
        %630 = vmatpush.msra.mxu0 %v623
        %631 = vmatpush.msra.mxu0 %v622
        %632 = vmatpush.msra.mxu0 %v621
        %633 = vmatpush.msra.mxu0 %v620
        %634 = vmatpush.msra.mxu0 %v619
        %635 = vmatpush.msra.mxu0 %v618
        %636 = vmatpush.msra.mxu0 %v617
        %637 = vmatpush.msra.mxu0 %v616
        %638 = vmatpush.msra.mxu0 %v615
        %639 = vmatpush.msra.mxu0 %v614
        %640 = vmatpush.msra.mxu0 %v613
        %641 = vmatpush.msra.mxu0 %v612
        %642 = vmatpush.msra.mxu0 %v611
        %643 = vmatmul.f32.gmra.mxu0 %v578
        %v644 = vpop.f32.mrf.mxu0
        %v645 = vadd.f32 0.0, %v644
        %646 = vmatmul.f32.gmra.mxu0 %v579
        %v647 = vpop.f32.mrf.mxu0
        %v648 = vadd.f32 0.0, %v647
        %649 = vmatmul.f32.gmra.mxu0 %v580
        %v650 = vpop.f32.mrf.mxu0
        %v651 = vadd.f32 0.0, %v650
        %652 = vmatmul.f32.gmra.mxu0 %v581
        %v653 = vpop.f32.mrf.mxu0
        %v654 = vadd.f32 0.0, %v653
        %655 = vmatmul.f32.gmra.mxu0 %v582
        %v656 = vpop.f32.mrf.mxu0
        %v657 = vadd.f32 0.0, %v656
        %658 = vmatmul.f32.gmra.mxu0 %v583
        %v659 = vpop.f32.mrf.mxu0
        %v660 = vadd.f32 0.0, %v659
        %661 = vmatmul.f32.gmra.mxu0 %v584
        %v662 = vpop.f32.mrf.mxu0
        %v663 = vadd.f32 0.0, %v662
        %664 = vmatmul.f32.gmra.mxu0 %v585
        %v665 = vpop.f32.mrf.mxu0
        %v666 = vadd.f32 0.0, %v665
        %667 = vmatmul.f32.gmra.mxu0 %v586
        %v668 = vpop.f32.mrf.mxu0
        %v669 = vadd.f32 0.0, %v668
        %670 = vmatmul.f32.gmra.mxu0 %v587
        %v671 = vpop.f32.mrf.mxu0
        %v672 = vadd.f32 0.0, %v671
        %673 = vmatmul.f32.gmra.mxu0 %v588
        %v674 = vpop.f32.mrf.mxu0
        %v675 = vadd.f32 0.0, %v674
        %676 = vmatmul.f32.gmra.mxu0 %v589
        %v677 = vpop.f32.mrf.mxu0
        %v678 = vadd.f32 0.0, %v677
        %679 = vmatmul.f32.gmra.mxu0 %v590
        %v680 = vpop.f32.mrf.mxu0
        %v681 = vadd.f32 0.0, %v680
        %682 = vmatmul.f32.gmra.mxu0 %v591
        %v683 = vpop.f32.mrf.mxu0
        %v684 = vadd.f32 0.0, %v683
        %685 = vmatmul.f32.gmra.mxu0 %v592
        %v686 = vpop.f32.mrf.mxu0
        %v687 = vadd.f32 0.0, %v686
        %688 = vmatmul.f32.gmra.mxu0 %v593
        %v689 = vpop.f32.mrf.mxu0
        %v690 = vadd.f32 0.0, %v689
        %691 = vmatmul.f32.gmra.mxu0 %v594
        %v692 = vpop.f32.mrf.mxu0
        %v693 = vadd.f32 0.0, %v692
        %694 = vmatmul.f32.gmra.mxu0 %v595
        %v695 = vpop.f32.mrf.mxu0
        %v696 = vadd.f32 0.0, %v695
        %697 = vmatmul.f32.gmra.mxu0 %v596
        %v698 = vpop.f32.mrf.mxu0
        %v699 = vadd.f32 0.0, %v698
        %700 = vmatmul.f32.gmra.mxu0 %v597
        %v701 = vpop.f32.mrf.mxu0
        %v702 = vadd.f32 0.0, %v701
        %703 = vmatmul.f32.gmra.mxu0 %v598
        %v704 = vpop.f32.mrf.mxu0
        %v705 = vadd.f32 0.0, %v704
        %706 = vmatmul.f32.gmra.mxu0 %v599
        %v707 = vpop.f32.mrf.mxu0
        %v708 = vadd.f32 0.0, %v707
        %709 = vmatmul.f32.gmra.mxu0 %v600
        %v710 = vpop.f32.mrf.mxu0
        %v711 = vadd.f32 0.0, %v710
        %712 = vmatmul.f32.gmra.mxu0 %v601
        %v713 = vpop.f32.mrf.mxu0
        %v714 = vadd.f32 0.0, %v713
        %715 = vmatmul.f32.gmra.mxu0 %v602
        %v716 = vpop.f32.mrf.mxu0
        %v717 = vadd.f32 0.0, %v716
        %718 = vmatmul.f32.gmra.mxu0 %v603
        %v719 = vpop.f32.mrf.mxu0
        %v720 = vadd.f32 0.0, %v719
        %721 = vmatmul.f32.gmra.mxu0 %v604
        %v722 = vpop.f32.mrf.mxu0
        %v723 = vadd.f32 0.0, %v722
        %724 = vmatmul.f32.gmra.mxu0 %v605
        %v725 = vpop.f32.mrf.mxu0
        %v726 = vadd.f32 0.0, %v725
        %727 = vmatmul.f32.gmra.mxu0 %v606
        %v728 = vpop.f32.mrf.mxu0
        %v729 = vadd.f32 0.0, %v728
        %730 = vmatmul.f32.gmra.mxu0 %v607
        %v731 = vpop.f32.mrf.mxu0
        %v732 = vadd.f32 0.0, %v731
        %733 = vmatmul.f32.gmra.mxu0 %v608
        %v734 = vpop.f32.mrf.mxu0
        %v735 = vadd.f32 0.0, %v734
        %736 = vmatmul.f32.gmra.mxu0 %v609
        %v737 = vpop.f32.mrf.mxu0
        %v738 = vadd.f32 0.0, %v737
        %739 = vdwg.mxu0
        %v740 = vadd.f32 %v483, %v645
        %v741 = vadd.f32 %v486, %v648
        %v742 = vadd.f32 %v489, %v651
        %v743 = vadd.f32 %v492, %v654
        %v744 = vadd.f32 %v495, %v657
        %v745 = vadd.f32 %v498, %v660
        %v746 = vadd.f32 %v501, %v663
        %v747 = vadd.f32 %v504, %v666
        %v748 = vadd.f32 %v507, %v669
        %v749 = vadd.f32 %v510, %v672
        %v750 = vadd.f32 %v513, %v675
        %v751 = vadd.f32 %v516, %v678
        %v752 = vadd.f32 %v519, %v681
        %v753 = vadd.f32 %v522, %v684
        %v754 = vadd.f32 %v525, %v687
        %v755 = vadd.f32 %v528, %v690
        %v756 = vadd.f32 %v531, %v693
        %v757 = vadd.f32 %v534, %v696
        %v758 = vadd.f32 %v537, %v699
        %v759 = vadd.f32 %v540, %v702
        %v760 = vadd.f32 %v543, %v705
        %v761 = vadd.f32 %v546, %v708
        %v762 = vadd.f32 %v549, %v711
        %v763 = vadd.f32 %v552, %v714
        %v764 = vadd.f32 %v555, %v717
        %v765 = vadd.f32 %v558, %v720
        %v766 = vadd.f32 %v561, %v723
        %v767 = vadd.f32 %v564, %v726
        %v768 = vadd.f32 %v567, %v729
        %v769 = vadd.f32 %v570, %v732
        %v770 = vadd.f32 %v573, %v735
        %v771 = vadd.f32 %v576, %v738
        %s772 = scalar_lea.vmem %s244, 24
        %v773 = vld [vmem:[%s772] sm:$0xff]
        %v774 = vld [vmem:[%s772 + $0x8] sm:$0xff]
        %v775 = vld [vmem:[%s772 + $0x18] sm:$0xff]
        %v776 = vld [vmem:[%s772 + $0x20] sm:$0xff]
        %v777 = vld [vmem:[%s772 + $0x30] sm:$0xff]
        %v778 = vld [vmem:[%s772 + $0x38] sm:$0xff]
        %v779 = vld [vmem:[%s772 + $0x48] sm:$0xff]
        %v780 = vld [vmem:[%s772 + $0x50] sm:$0xff]
        %v781 = vld [vmem:[%s772 + $0x60] sm:$0xff]
        %v782 = vld [vmem:[%s772 + $0x68] sm:$0xff]
        %v783 = vld [vmem:[%s772 + $0x78] sm:$0xff]
        %v784 = vld [vmem:[%s772 + $0x80] sm:$0xff]
        %v785 = vld [vmem:[%s772 + $0x90] sm:$0xff]
        %v786 = vld [vmem:[%s772 + $0x98] sm:$0xff]
        %v787 = vld [vmem:[%s772 + $0xa8] sm:$0xff]
        %v788 = vld [vmem:[%s772 + $0xb0] sm:$0xff]
        %v789 = vld [vmem:[%s772 + $0xc0] sm:$0xff]
        %v790 = vld [vmem:[%s772 + $0xc8] sm:$0xff]
        %v791 = vld [vmem:[%s772 + $0xd8] sm:$0xff]
        %v792 = vld [vmem:[%s772 + $0xe0] sm:$0xff]
        %v793 = vld [vmem:[%s772 + $0xf0] sm:$0xff]
        %v794 = vld [vmem:[%s772 + $0xf8] sm:$0xff]
        %v795 = vld [vmem:[%s772 + $0x108] sm:$0xff]
        %v796 = vld [vmem:[%s772 + $0x110] sm:$0xff]
        %v797 = vld [vmem:[%s772 + $0x120] sm:$0xff]
        %v798 = vld [vmem:[%s772 + $0x128] sm:$0xff]
        %v799 = vld [vmem:[%s772 + $0x138] sm:$0xff]
        %v800 = vld [vmem:[%s772 + $0x140] sm:$0xff]
        %v801 = vld [vmem:[%s772 + $0x150] sm:$0xff]
        %v802 = vld [vmem:[%s772 + $0x158] sm:$0xff]
        %v803 = vld [vmem:[%s772 + $0x168] sm:$0xff]
        %v804 = vld [vmem:[%s772 + $0x170] sm:$0xff]
        %s805 = scalar_lea.vmem %s248, 384
        %v806 = vld [vmem:[%s805] sm:$0xff]
        %v807 = vld [vmem:[%s805 + $0x8] sm:$0xff]
        %v808 = vld [vmem:[%s805 + $0x10] sm:$0xff]
        %v809 = vld [vmem:[%s805 + $0x18] sm:$0xff]
        %v810 = vld [vmem:[%s805 + $0x20] sm:$0xff]
        %v811 = vld [vmem:[%s805 + $0x28] sm:$0xff]
        %v812 = vld [vmem:[%s805 + $0x30] sm:$0xff]
        %v813 = vld [vmem:[%s805 + $0x38] sm:$0xff]
        %v814 = vld [vmem:[%s805 + $0x40] sm:$0xff]
        %v815 = vld [vmem:[%s805 + $0x48] sm:$0xff]
        %v816 = vld [vmem:[%s805 + $0x50] sm:$0xff]
        %v817 = vld [vmem:[%s805 + $0x58] sm:$0xff]
        %v818 = vld [vmem:[%s805 + $0x60] sm:$0xff]
        %v819 = vld [vmem:[%s805 + $0x68] sm:$0xff]
        %v820 = vld [vmem:[%s805 + $0x70] sm:$0xff]
        %v821 = vld [vmem:[%s805 + $0x78] sm:$0xff]
        %822 = vmatpush.msra.mxu0 %v821
        %823 = vmatpush.msra.mxu0 %v820
        %824 = vmatpush.msra.mxu0 %v819
        %825 = vmatpush.msra.mxu0 %v818
        %826 = vmatpush.msra.mxu0 %v817
        %827 = vmatpush.msra.mxu0 %v816
        %828 = vmatpush.msra.mxu0 %v815
        %829 = vmatpush.msra.mxu0 %v814
        %830 = vmatpush.msra.mxu0 %v813
        %831 = vmatpush.msra.mxu0 %v812
        %832 = vmatpush.msra.mxu0 %v811
        %833 = vmatpush.msra.mxu0 %v810
        %834 = vmatpush.msra.mxu0 %v809
        %835 = vmatpush.msra.mxu0 %v808
        %836 = vmatpush.msra.mxu0 %v807
        %837 = vmatpush.msra.mxu0 %v806
        %838 = vmatmul.f32.gmra.mxu0 %v773
        %v839 = vpop.f32.mrf.mxu0
        %v840 = vadd.f32 0.0, %v839
        %841 = vmatmul.f32.gmra.mxu0 %v774
        %v842 = vpop.f32.mrf.mxu0
        %v843 = vadd.f32 0.0, %v842
        %844 = vmatmul.f32.gmra.mxu0 %v775
        %v845 = vpop.f32.mrf.mxu0
        %v846 = vadd.f32 0.0, %v845
        %847 = vmatmul.f32.gmra.mxu0 %v776
        %v848 = vpop.f32.mrf.mxu0
        %v849 = vadd.f32 0.0, %v848
        %850 = vmatmul.f32.gmra.mxu0 %v777
        %v851 = vpop.f32.mrf.mxu0
        %v852 = vadd.f32 0.0, %v851
        %853 = vmatmul.f32.gmra.mxu0 %v778
        %v854 = vpop.f32.mrf.mxu0
        %v855 = vadd.f32 0.0, %v854
        %856 = vmatmul.f32.gmra.mxu0 %v779
        %v857 = vpop.f32.mrf.mxu0
        %v858 = vadd.f32 0.0, %v857
        %859 = vmatmul.f32.gmra.mxu0 %v780
        %v860 = vpop.f32.mrf.mxu0
        %v861 = vadd.f32 0.0, %v860
        %862 = vmatmul.f32.gmra.mxu0 %v781
        %v863 = vpop.f32.mrf.mxu0
        %v864 = vadd.f32 0.0, %v863
        %865 = vmatmul.f32.gmra.mxu0 %v782
        %v866 = vpop.f32.mrf.mxu0
        %v867 = vadd.f32 0.0, %v866
        %868 = vmatmul.f32.gmra.mxu0 %v783
        %v869 = vpop.f32.mrf.mxu0
        %v870 = vadd.f32 0.0, %v869
        %871 = vmatmul.f32.gmra.mxu0 %v784
        %v872 = vpop.f32.mrf.mxu0
        %v873 = vadd.f32 0.0, %v872
        %874 = vmatmul.f32.gmra.mxu0 %v785
        %v875 = vpop.f32.mrf.mxu0
        %v876 = vadd.f32 0.0, %v875
        %877 = vmatmul.f32.gmra.mxu0 %v786
        %v878 = vpop.f32.mrf.mxu0
        %v879 = vadd.f32 0.0, %v878
        %880 = vmatmul.f32.gmra.mxu0 %v787
        %v881 = vpop.f32.mrf.mxu0
        %v882 = vadd.f32 0.0, %v881
        %883 = vmatmul.f32.gmra.mxu0 %v788
        %v884 = vpop.f32.mrf.mxu0
        %v885 = vadd.f32 0.0, %v884
        %886 = vmatmul.f32.gmra.mxu0 %v789
        %v887 = vpop.f32.mrf.mxu0
        %v888 = vadd.f32 0.0, %v887
        %889 = vmatmul.f32.gmra.mxu0 %v790
        %v890 = vpop.f32.mrf.mxu0
        %v891 = vadd.f32 0.0, %v890
        %892 = vmatmul.f32.gmra.mxu0 %v791
        %v893 = vpop.f32.mrf.mxu0
        %v894 = vadd.f32 0.0, %v893
        %895 = vmatmul.f32.gmra.mxu0 %v792
        %v896 = vpop.f32.mrf.mxu0
        %v897 = vadd.f32 0.0, %v896
        %898 = vmatmul.f32.gmra.mxu0 %v793
        %v899 = vpop.f32.mrf.mxu0
        %v900 = vadd.f32 0.0, %v899
        %901 = vmatmul.f32.gmra.mxu0 %v794
        %v902 = vpop.f32.mrf.mxu0
        %v903 = vadd.f32 0.0, %v902
        %904 = vmatmul.f32.gmra.mxu0 %v795
        %v905 = vpop.f32.mrf.mxu0
        %v906 = vadd.f32 0.0, %v905
        %907 = vmatmul.f32.gmra.mxu0 %v796
        %v908 = vpop.f32.mrf.mxu0
        %v909 = vadd.f32 0.0, %v908
        %910 = vmatmul.f32.gmra.mxu0 %v797
        %v911 = vpop.f32.mrf.mxu0
        %v912 = vadd.f32 0.0, %v911
        %913 = vmatmul.f32.gmra.mxu0 %v798
        %v914 = vpop.f32.mrf.mxu0
        %v915 = vadd.f32 0.0, %v914
        %916 = vmatmul.f32.gmra.mxu0 %v799
        %v917 = vpop.f32.mrf.mxu0
        %v918 = vadd.f32 0.0, %v917
        %919 = vmatmul.f32.gmra.mxu0 %v800
        %v920 = vpop.f32.mrf.mxu0
        %v921 = vadd.f32 0.0, %v920
        %922 = vmatmul.f32.gmra.mxu0 %v801
        %v923 = vpop.f32.mrf.mxu0
        %v924 = vadd.f32 0.0, %v923
        %925 = vmatmul.f32.gmra.mxu0 %v802
        %v926 = vpop.f32.mrf.mxu0
        %v927 = vadd.f32 0.0, %v926
        %928 = vmatmul.f32.gmra.mxu0 %v803
        %v929 = vpop.f32.mrf.mxu0
        %v930 = vadd.f32 0.0, %v929
        %931 = vmatmul.f32.gmra.mxu0 %v804
        %v932 = vpop.f32.mrf.mxu0
        %v933 = vadd.f32 0.0, %v932
        %934 = vdwg.mxu0
        %v935 = vadd.f32 %v740, %v840
        %v936 = vadd.f32 %v741, %v843
        %v937 = vadd.f32 %v742, %v846
        %v938 = vadd.f32 %v743, %v849
        %v939 = vadd.f32 %v744, %v852
        %v940 = vadd.f32 %v745, %v855
        %v941 = vadd.f32 %v746, %v858
        %v942 = vadd.f32 %v747, %v861
        %v943 = vadd.f32 %v748, %v864
        %v944 = vadd.f32 %v749, %v867
        %v945 = vadd.f32 %v750, %v870
        %v946 = vadd.f32 %v751, %v873
        %v947 = vadd.f32 %v752, %v876
        %v948 = vadd.f32 %v753, %v879
        %v949 = vadd.f32 %v754, %v882
        %v950 = vadd.f32 %v755, %v885
        %v951 = vadd.f32 %v756, %v888
        %v952 = vadd.f32 %v757, %v891
        %v953 = vadd.f32 %v758, %v894
        %v954 = vadd.f32 %v759, %v897
        %v955 = vadd.f32 %v760, %v900
        %v956 = vadd.f32 %v761, %v903
        %v957 = vadd.f32 %v762, %v906
        %v958 = vadd.f32 %v763, %v909
        %v959 = vadd.f32 %v764, %v912
        %v960 = vadd.f32 %v765, %v915
        %v961 = vadd.f32 %v766, %v918
        %v962 = vadd.f32 %v767, %v921
        %v963 = vadd.f32 %v768, %v924
        %v964 = vadd.f32 %v769, %v927
        %v965 = vadd.f32 %v770, %v930
        %v966 = vadd.f32 %v771, %v933
        %v967 = vld [vmem:[%s772 + $0x1] sm:$0xff]
        %v968 = vld [vmem:[%s772 + $0x9] sm:$0xff]
        %v969 = vld [vmem:[%s772 + $0x19] sm:$0xff]
        %v970 = vld [vmem:[%s772 + $0x21] sm:$0xff]
        %v971 = vld [vmem:[%s772 + $0x31] sm:$0xff]
        %v972 = vld [vmem:[%s772 + $0x39] sm:$0xff]
        %v973 = vld [vmem:[%s772 + $0x49] sm:$0xff]
        %v974 = vld [vmem:[%s772 + $0x51] sm:$0xff]
        %v975 = vld [vmem:[%s772 + $0x61] sm:$0xff]
        %v976 = vld [vmem:[%s772 + $0x69] sm:$0xff]
        %v977 = vld [vmem:[%s772 + $0x79] sm:$0xff]
        %v978 = vld [vmem:[%s772 + $0x81] sm:$0xff]
        %v979 = vld [vmem:[%s772 + $0x91] sm:$0xff]
        %v980 = vld [vmem:[%s772 + $0x99] sm:$0xff]
        %v981 = vld [vmem:[%s772 + $0xa9] sm:$0xff]
        %v982 = vld [vmem:[%s772 + $0xb1] sm:$0xff]
        %v983 = vld [vmem:[%s772 + $0xc1] sm:$0xff]
        %v984 = vld [vmem:[%s772 + $0xc9] sm:$0xff]
        %v985 = vld [vmem:[%s772 + $0xd9] sm:$0xff]
        %v986 = vld [vmem:[%s772 + $0xe1] sm:$0xff]
        %v987 = vld [vmem:[%s772 + $0xf1] sm:$0xff]
        %v988 = vld [vmem:[%s772 + $0xf9] sm:$0xff]
        %v989 = vld [vmem:[%s772 + $0x109] sm:$0xff]
        %v990 = vld [vmem:[%s772 + $0x111] sm:$0xff]
        %v991 = vld [vmem:[%s772 + $0x121] sm:$0xff]
        %v992 = vld [vmem:[%s772 + $0x129] sm:$0xff]
        %v993 = vld [vmem:[%s772 + $0x139] sm:$0xff]
        %v994 = vld [vmem:[%s772 + $0x141] sm:$0xff]
        %v995 = vld [vmem:[%s772 + $0x151] sm:$0xff]
        %v996 = vld [vmem:[%s772 + $0x159] sm:$0xff]
        %v997 = vld [vmem:[%s772 + $0x169] sm:$0xff]
        %v998 = vld [vmem:[%s772 + $0x171] sm:$0xff]
        %s999 = scalar_lea.vmem %s248, 512
        %v1000 = vld [vmem:[%s999] sm:$0xff]
        %v1001 = vld [vmem:[%s999 + $0x8] sm:$0xff]
        %v1002 = vld [vmem:[%s999 + $0x10] sm:$0xff]
        %v1003 = vld [vmem:[%s999 + $0x18] sm:$0xff]
        %v1004 = vld [vmem:[%s999 + $0x20] sm:$0xff]
        %v1005 = vld [vmem:[%s999 + $0x28] sm:$0xff]
        %v1006 = vld [vmem:[%s999 + $0x30] sm:$0xff]
        %v1007 = vld [vmem:[%s999 + $0x38] sm:$0xff]
        %v1008 = vld [vmem:[%s999 + $0x40] sm:$0xff]
        %v1009 = vld [vmem:[%s999 + $0x48] sm:$0xff]
        %v1010 = vld [vmem:[%s999 + $0x50] sm:$0xff]
        %v1011 = vld [vmem:[%s999 + $0x58] sm:$0xff]
        %v1012 = vld [vmem:[%s999 + $0x60] sm:$0xff]
        %v1013 = vld [vmem:[%s999 + $0x68] sm:$0xff]
        %v1014 = vld [vmem:[%s999 + $0x70] sm:$0xff]
        %v1015 = vld [vmem:[%s999 + $0x78] sm:$0xff]
        %1016 = vmatpush.msra.mxu0 %v1015
        %1017 = vmatpush.msra.mxu0 %v1014
        %1018 = vmatpush.msra.mxu0 %v1013
        %1019 = vmatpush.msra.mxu0 %v1012
        %1020 = vmatpush.msra.mxu0 %v1011
        %1021 = vmatpush.msra.mxu0 %v1010
        %1022 = vmatpush.msra.mxu0 %v1009
        %1023 = vmatpush.msra.mxu0 %v1008
        %1024 = vmatpush.msra.mxu0 %v1007
        %1025 = vmatpush.msra.mxu0 %v1006
        %1026 = vmatpush.msra.mxu0 %v1005
        %1027 = vmatpush.msra.mxu0 %v1004
        %1028 = vmatpush.msra.mxu0 %v1003
        %1029 = vmatpush.msra.mxu0 %v1002
        %1030 = vmatpush.msra.mxu0 %v1001
        %1031 = vmatpush.msra.mxu0 %v1000
        %1032 = vmatmul.f32.gmra.mxu0 %v967
        %v1033 = vpop.f32.mrf.mxu0
        %v1034 = vadd.f32 0.0, %v1033
        %1035 = vmatmul.f32.gmra.mxu0 %v968
        %v1036 = vpop.f32.mrf.mxu0
        %v1037 = vadd.f32 0.0, %v1036
        %1038 = vmatmul.f32.gmra.mxu0 %v969
        %v1039 = vpop.f32.mrf.mxu0
        %v1040 = vadd.f32 0.0, %v1039
        %1041 = vmatmul.f32.gmra.mxu0 %v970
        %v1042 = vpop.f32.mrf.mxu0
        %v1043 = vadd.f32 0.0, %v1042
        %1044 = vmatmul.f32.gmra.mxu0 %v971
        %v1045 = vpop.f32.mrf.mxu0
        %v1046 = vadd.f32 0.0, %v1045
        %1047 = vmatmul.f32.gmra.mxu0 %v972
        %v1048 = vpop.f32.mrf.mxu0
        %v1049 = vadd.f32 0.0, %v1048
        %1050 = vmatmul.f32.gmra.mxu0 %v973
        %v1051 = vpop.f32.mrf.mxu0
        %v1052 = vadd.f32 0.0, %v1051
        %1053 = vmatmul.f32.gmra.mxu0 %v974
        %v1054 = vpop.f32.mrf.mxu0
        %v1055 = vadd.f32 0.0, %v1054
        %1056 = vmatmul.f32.gmra.mxu0 %v975
        %v1057 = vpop.f32.mrf.mxu0
        %v1058 = vadd.f32 0.0, %v1057
        %1059 = vmatmul.f32.gmra.mxu0 %v976
        %v1060 = vpop.f32.mrf.mxu0
        %v1061 = vadd.f32 0.0, %v1060
        %1062 = vmatmul.f32.gmra.mxu0 %v977
        %v1063 = vpop.f32.mrf.mxu0
        %v1064 = vadd.f32 0.0, %v1063
        %1065 = vmatmul.f32.gmra.mxu0 %v978
        %v1066 = vpop.f32.mrf.mxu0
        %v1067 = vadd.f32 0.0, %v1066
        %1068 = vmatmul.f32.gmra.mxu0 %v979
        %v1069 = vpop.f32.mrf.mxu0
        %v1070 = vadd.f32 0.0, %v1069
        %1071 = vmatmul.f32.gmra.mxu0 %v980
        %v1072 = vpop.f32.mrf.mxu0
        %v1073 = vadd.f32 0.0, %v1072
        %1074 = vmatmul.f32.gmra.mxu0 %v981
        %v1075 = vpop.f32.mrf.mxu0
        %v1076 = vadd.f32 0.0, %v1075
        %1077 = vmatmul.f32.gmra.mxu0 %v982
        %v1078 = vpop.f32.mrf.mxu0
        %v1079 = vadd.f32 0.0, %v1078
        %1080 = vmatmul.f32.gmra.mxu0 %v983
        %v1081 = vpop.f32.mrf.mxu0
        %v1082 = vadd.f32 0.0, %v1081
        %1083 = vmatmul.f32.gmra.mxu0 %v984
        %v1084 = vpop.f32.mrf.mxu0
        %v1085 = vadd.f32 0.0, %v1084
        %1086 = vmatmul.f32.gmra.mxu0 %v985
        %v1087 = vpop.f32.mrf.mxu0
        %v1088 = vadd.f32 0.0, %v1087
        %1089 = vmatmul.f32.gmra.mxu0 %v986
        %v1090 = vpop.f32.mrf.mxu0
        %v1091 = vadd.f32 0.0, %v1090
        %1092 = vmatmul.f32.gmra.mxu0 %v987
        %v1093 = vpop.f32.mrf.mxu0
        %v1094 = vadd.f32 0.0, %v1093
        %1095 = vmatmul.f32.gmra.mxu0 %v988
        %v1096 = vpop.f32.mrf.mxu0
        %v1097 = vadd.f32 0.0, %v1096
        %1098 = vmatmul.f32.gmra.mxu0 %v989
        %v1099 = vpop.f32.mrf.mxu0
        %v1100 = vadd.f32 0.0, %v1099
        %1101 = vmatmul.f32.gmra.mxu0 %v990
        %v1102 = vpop.f32.mrf.mxu0
        %v1103 = vadd.f32 0.0, %v1102
        %1104 = vmatmul.f32.gmra.mxu0 %v991
        %v1105 = vpop.f32.mrf.mxu0
        %v1106 = vadd.f32 0.0, %v1105
        %1107 = vmatmul.f32.gmra.mxu0 %v992
        %v1108 = vpop.f32.mrf.mxu0
        %v1109 = vadd.f32 0.0, %v1108
        %1110 = vmatmul.f32.gmra.mxu0 %v993
        %v1111 = vpop.f32.mrf.mxu0
        %v1112 = vadd.f32 0.0, %v1111
        %1113 = vmatmul.f32.gmra.mxu0 %v994
        %v1114 = vpop.f32.mrf.mxu0
        %v1115 = vadd.f32 0.0, %v1114
        %1116 = vmatmul.f32.gmra.mxu0 %v995
        %v1117 = vpop.f32.mrf.mxu0
        %v1118 = vadd.f32 0.0, %v1117
        %1119 = vmatmul.f32.gmra.mxu0 %v996
        %v1120 = vpop.f32.mrf.mxu0
        %v1121 = vadd.f32 0.0, %v1120
        %1122 = vmatmul.f32.gmra.mxu0 %v997
        %v1123 = vpop.f32.mrf.mxu0
        %v1124 = vadd.f32 0.0, %v1123
        %1125 = vmatmul.f32.gmra.mxu0 %v998
        %v1126 = vpop.f32.mrf.mxu0
        %v1127 = vadd.f32 0.0, %v1126
        %1128 = vdwg.mxu0
        %v1129 = vadd.f32 %v935, %v1034
        %v1130 = vadd.f32 %v936, %v1037
        %v1131 = vadd.f32 %v937, %v1040
        %v1132 = vadd.f32 %v938, %v1043
        %v1133 = vadd.f32 %v939, %v1046
        %v1134 = vadd.f32 %v940, %v1049
        %v1135 = vadd.f32 %v941, %v1052
        %v1136 = vadd.f32 %v942, %v1055
        %v1137 = vadd.f32 %v943, %v1058
        %v1138 = vadd.f32 %v944, %v1061
        %v1139 = vadd.f32 %v945, %v1064
        %v1140 = vadd.f32 %v946, %v1067
        %v1141 = vadd.f32 %v947, %v1070
        %v1142 = vadd.f32 %v948, %v1073
        %v1143 = vadd.f32 %v949, %v1076
        %v1144 = vadd.f32 %v950, %v1079
        %v1145 = vadd.f32 %v951, %v1082
        %v1146 = vadd.f32 %v952, %v1085
        %v1147 = vadd.f32 %v953, %v1088
        %v1148 = vadd.f32 %v954, %v1091
        %v1149 = vadd.f32 %v955, %v1094
        %v1150 = vadd.f32 %v956, %v1097
        %v1151 = vadd.f32 %v957, %v1100
        %v1152 = vadd.f32 %v958, %v1103
        %v1153 = vadd.f32 %v959, %v1106
        %v1154 = vadd.f32 %v960, %v1109
        %v1155 = vadd.f32 %v961, %v1112
        %v1156 = vadd.f32 %v962, %v1115
        %v1157 = vadd.f32 %v963, %v1118
        %v1158 = vadd.f32 %v964, %v1121
        %v1159 = vadd.f32 %v965, %v1124
        %v1160 = vadd.f32 %v966, %v1127
        %v1161 = vld [vmem:[%s772 + $0x2] sm:$0xff]
        %v1162 = vld [vmem:[%s772 + $0xa] sm:$0xff]
        %v1163 = vld [vmem:[%s772 + $0x1a] sm:$0xff]
        %v1164 = vld [vmem:[%s772 + $0x22] sm:$0xff]
        %v1165 = vld [vmem:[%s772 + $0x32] sm:$0xff]
        %v1166 = vld [vmem:[%s772 + $0x3a] sm:$0xff]
        %v1167 = vld [vmem:[%s772 + $0x4a] sm:$0xff]
        %v1168 = vld [vmem:[%s772 + $0x52] sm:$0xff]
        %v1169 = vld [vmem:[%s772 + $0x62] sm:$0xff]
        %v1170 = vld [vmem:[%s772 + $0x6a] sm:$0xff]
        %v1171 = vld [vmem:[%s772 + $0x7a] sm:$0xff]
        %v1172 = vld [vmem:[%s772 + $0x82] sm:$0xff]
        %v1173 = vld [vmem:[%s772 + $0x92] sm:$0xff]
        %v1174 = vld [vmem:[%s772 + $0x9a] sm:$0xff]
        %v1175 = vld [vmem:[%s772 + $0xaa] sm:$0xff]
        %v1176 = vld [vmem:[%s772 + $0xb2] sm:$0xff]
        %v1177 = vld [vmem:[%s772 + $0xc2] sm:$0xff]
        %v1178 = vld [vmem:[%s772 + $0xca] sm:$0xff]
        %v1179 = vld [vmem:[%s772 + $0xda] sm:$0xff]
        %v1180 = vld [vmem:[%s772 + $0xe2] sm:$0xff]
        %v1181 = vld [vmem:[%s772 + $0xf2] sm:$0xff]
        %v1182 = vld [vmem:[%s772 + $0xfa] sm:$0xff]
        %v1183 = vld [vmem:[%s772 + $0x10a] sm:$0xff]
        %v1184 = vld [vmem:[%s772 + $0x112] sm:$0xff]
        %v1185 = vld [vmem:[%s772 + $0x122] sm:$0xff]
        %v1186 = vld [vmem:[%s772 + $0x12a] sm:$0xff]
        %v1187 = vld [vmem:[%s772 + $0x13a] sm:$0xff]
        %v1188 = vld [vmem:[%s772 + $0x142] sm:$0xff]
        %v1189 = vld [vmem:[%s772 + $0x152] sm:$0xff]
        %v1190 = vld [vmem:[%s772 + $0x15a] sm:$0xff]
        %v1191 = vld [vmem:[%s772 + $0x16a] sm:$0xff]
        %v1192 = vld [vmem:[%s772 + $0x172] sm:$0xff]
        %s1193 = scalar_lea.vmem %s248, 640
        %v1194 = vld [vmem:[%s1193] sm:$0xff]
        %v1195 = vld [vmem:[%s1193 + $0x8] sm:$0xff]
        %v1196 = vld [vmem:[%s1193 + $0x10] sm:$0xff]
        %v1197 = vld [vmem:[%s1193 + $0x18] sm:$0xff]
        %v1198 = vld [vmem:[%s1193 + $0x20] sm:$0xff]
        %v1199 = vld [vmem:[%s1193 + $0x28] sm:$0xff]
        %v1200 = vld [vmem:[%s1193 + $0x30] sm:$0xff]
        %v1201 = vld [vmem:[%s1193 + $0x38] sm:$0xff]
        %v1202 = vld [vmem:[%s1193 + $0x40] sm:$0xff]
        %v1203 = vld [vmem:[%s1193 + $0x48] sm:$0xff]
        %v1204 = vld [vmem:[%s1193 + $0x50] sm:$0xff]
        %v1205 = vld [vmem:[%s1193 + $0x58] sm:$0xff]
        %v1206 = vld [vmem:[%s1193 + $0x60] sm:$0xff]
        %v1207 = vld [vmem:[%s1193 + $0x68] sm:$0xff]
        %v1208 = vld [vmem:[%s1193 + $0x70] sm:$0xff]
        %v1209 = vld [vmem:[%s1193 + $0x78] sm:$0xff]
        %1210 = vmatpush.msra.mxu0 %v1209
        %1211 = vmatpush.msra.mxu0 %v1208
        %1212 = vmatpush.msra.mxu0 %v1207
        %1213 = vmatpush.msra.mxu0 %v1206
        %1214 = vmatpush.msra.mxu0 %v1205
        %1215 = vmatpush.msra.mxu0 %v1204
        %1216 = vmatpush.msra.mxu0 %v1203
        %1217 = vmatpush.msra.mxu0 %v1202
        %1218 = vmatpush.msra.mxu0 %v1201
        %1219 = vmatpush.msra.mxu0 %v1200
        %1220 = vmatpush.msra.mxu0 %v1199
        %1221 = vmatpush.msra.mxu0 %v1198
        %1222 = vmatpush.msra.mxu0 %v1197
        %1223 = vmatpush.msra.mxu0 %v1196
        %1224 = vmatpush.msra.mxu0 %v1195
        %1225 = vmatpush.msra.mxu0 %v1194
        %1226 = vmatmul.f32.gmra.mxu0 %v1161
        %v1227 = vpop.f32.mrf.mxu0
        %v1228 = vadd.f32 0.0, %v1227
        %1229 = vmatmul.f32.gmra.mxu0 %v1162
        %v1230 = vpop.f32.mrf.mxu0
        %v1231 = vadd.f32 0.0, %v1230
        %1232 = vmatmul.f32.gmra.mxu0 %v1163
        %v1233 = vpop.f32.mrf.mxu0
        %v1234 = vadd.f32 0.0, %v1233
        %1235 = vmatmul.f32.gmra.mxu0 %v1164
        %v1236 = vpop.f32.mrf.mxu0
        %v1237 = vadd.f32 0.0, %v1236
        %1238 = vmatmul.f32.gmra.mxu0 %v1165
        %v1239 = vpop.f32.mrf.mxu0
        %v1240 = vadd.f32 0.0, %v1239
        %1241 = vmatmul.f32.gmra.mxu0 %v1166
        %v1242 = vpop.f32.mrf.mxu0
        %v1243 = vadd.f32 0.0, %v1242
        %1244 = vmatmul.f32.gmra.mxu0 %v1167
        %v1245 = vpop.f32.mrf.mxu0
        %v1246 = vadd.f32 0.0, %v1245
        %1247 = vmatmul.f32.gmra.mxu0 %v1168
        %v1248 = vpop.f32.mrf.mxu0
        %v1249 = vadd.f32 0.0, %v1248
        %1250 = vmatmul.f32.gmra.mxu0 %v1169
        %v1251 = vpop.f32.mrf.mxu0
        %v1252 = vadd.f32 0.0, %v1251
        %1253 = vmatmul.f32.gmra.mxu0 %v1170
        %v1254 = vpop.f32.mrf.mxu0
        %v1255 = vadd.f32 0.0, %v1254
        %1256 = vmatmul.f32.gmra.mxu0 %v1171
        %v1257 = vpop.f32.mrf.mxu0
        %v1258 = vadd.f32 0.0, %v1257
        %1259 = vmatmul.f32.gmra.mxu0 %v1172
        %v1260 = vpop.f32.mrf.mxu0
        %v1261 = vadd.f32 0.0, %v1260
        %1262 = vmatmul.f32.gmra.mxu0 %v1173
        %v1263 = vpop.f32.mrf.mxu0
        %v1264 = vadd.f32 0.0, %v1263
        %1265 = vmatmul.f32.gmra.mxu0 %v1174
        %v1266 = vpop.f32.mrf.mxu0
        %v1267 = vadd.f32 0.0, %v1266
        %1268 = vmatmul.f32.gmra.mxu0 %v1175
        %v1269 = vpop.f32.mrf.mxu0
        %v1270 = vadd.f32 0.0, %v1269
        %1271 = vmatmul.f32.gmra.mxu0 %v1176
        %v1272 = vpop.f32.mrf.mxu0
        %v1273 = vadd.f32 0.0, %v1272
        %1274 = vmatmul.f32.gmra.mxu0 %v1177
        %v1275 = vpop.f32.mrf.mxu0
        %v1276 = vadd.f32 0.0, %v1275
        %1277 = vmatmul.f32.gmra.mxu0 %v1178
        %v1278 = vpop.f32.mrf.mxu0
        %v1279 = vadd.f32 0.0, %v1278
        %1280 = vmatmul.f32.gmra.mxu0 %v1179
        %v1281 = vpop.f32.mrf.mxu0
        %v1282 = vadd.f32 0.0, %v1281
        %1283 = vmatmul.f32.gmra.mxu0 %v1180
        %v1284 = vpop.f32.mrf.mxu0
        %v1285 = vadd.f32 0.0, %v1284
        %1286 = vmatmul.f32.gmra.mxu0 %v1181
        %v1287 = vpop.f32.mrf.mxu0
        %v1288 = vadd.f32 0.0, %v1287
        %1289 = vmatmul.f32.gmra.mxu0 %v1182
        %v1290 = vpop.f32.mrf.mxu0
        %v1291 = vadd.f32 0.0, %v1290
        %1292 = vmatmul.f32.gmra.mxu0 %v1183
        %v1293 = vpop.f32.mrf.mxu0
        %v1294 = vadd.f32 0.0, %v1293
        %1295 = vmatmul.f32.gmra.mxu0 %v1184
        %v1296 = vpop.f32.mrf.mxu0
        %v1297 = vadd.f32 0.0, %v1296
        %1298 = vmatmul.f32.gmra.mxu0 %v1185
        %v1299 = vpop.f32.mrf.mxu0
        %v1300 = vadd.f32 0.0, %v1299
        %1301 = vmatmul.f32.gmra.mxu0 %v1186
        %v1302 = vpop.f32.mrf.mxu0
        %v1303 = vadd.f32 0.0, %v1302
        %1304 = vmatmul.f32.gmra.mxu0 %v1187
        %v1305 = vpop.f32.mrf.mxu0
        %v1306 = vadd.f32 0.0, %v1305
        %1307 = vmatmul.f32.gmra.mxu0 %v1188
        %v1308 = vpop.f32.mrf.mxu0
        %v1309 = vadd.f32 0.0, %v1308
        %1310 = vmatmul.f32.gmra.mxu0 %v1189
        %v1311 = vpop.f32.mrf.mxu0
        %v1312 = vadd.f32 0.0, %v1311
        %1313 = vmatmul.f32.gmra.mxu0 %v1190
        %v1314 = vpop.f32.mrf.mxu0
        %v1315 = vadd.f32 0.0, %v1314
        %1316 = vmatmul.f32.gmra.mxu0 %v1191
        %v1317 = vpop.f32.mrf.mxu0
        %v1318 = vadd.f32 0.0, %v1317
        %1319 = vmatmul.f32.gmra.mxu0 %v1192
        %v1320 = vpop.f32.mrf.mxu0
        %v1321 = vadd.f32 0.0, %v1320
        %1322 = vdwg.mxu0
        %v1323 = vadd.f32 %v1129, %v1228
        %v1324 = vadd.f32 %v1130, %v1231
        %v1325 = vadd.f32 %v1131, %v1234
        %v1326 = vadd.f32 %v1132, %v1237
        %v1327 = vadd.f32 %v1133, %v1240
        %v1328 = vadd.f32 %v1134, %v1243
        %v1329 = vadd.f32 %v1135, %v1246
        %v1330 = vadd.f32 %v1136, %v1249
        %v1331 = vadd.f32 %v1137, %v1252
        %v1332 = vadd.f32 %v1138, %v1255
        %v1333 = vadd.f32 %v1139, %v1258
        %v1334 = vadd.f32 %v1140, %v1261
        %v1335 = vadd.f32 %v1141, %v1264
        %v1336 = vadd.f32 %v1142, %v1267
        %v1337 = vadd.f32 %v1143, %v1270
        %v1338 = vadd.f32 %v1144, %v1273
        %v1339 = vadd.f32 %v1145, %v1276
        %v1340 = vadd.f32 %v1146, %v1279
        %v1341 = vadd.f32 %v1147, %v1282
        %v1342 = vadd.f32 %v1148, %v1285
        %v1343 = vadd.f32 %v1149, %v1288
        %v1344 = vadd.f32 %v1150, %v1291
        %v1345 = vadd.f32 %v1151, %v1294
        %v1346 = vadd.f32 %v1152, %v1297
        %v1347 = vadd.f32 %v1153, %v1300
        %v1348 = vadd.f32 %v1154, %v1303
        %v1349 = vadd.f32 %v1155, %v1306
        %v1350 = vadd.f32 %v1156, %v1309
        %v1351 = vadd.f32 %v1157, %v1312
        %v1352 = vadd.f32 %v1158, %v1315
        %v1353 = vadd.f32 %v1159, %v1318
        %v1354 = vadd.f32 %v1160, %v1321
        %s1355 = scalar_lea.vmem %s244, 48
        %v1356 = vld [vmem:[%s1355] sm:$0xff]
        %v1357 = vld [vmem:[%s1355 + $0x8] sm:$0xff]
        %v1358 = vld [vmem:[%s1355 + $0x18] sm:$0xff]
        %v1359 = vld [vmem:[%s1355 + $0x20] sm:$0xff]
        %v1360 = vld [vmem:[%s1355 + $0x30] sm:$0xff]
        %v1361 = vld [vmem:[%s1355 + $0x38] sm:$0xff]
        %v1362 = vld [vmem:[%s1355 + $0x48] sm:$0xff]
        %v1363 = vld [vmem:[%s1355 + $0x50] sm:$0xff]
        %v1364 = vld [vmem:[%s1355 + $0x60] sm:$0xff]
        %v1365 = vld [vmem:[%s1355 + $0x68] sm:$0xff]
        %v1366 = vld [vmem:[%s1355 + $0x78] sm:$0xff]
        %v1367 = vld [vmem:[%s1355 + $0x80] sm:$0xff]
        %v1368 = vld [vmem:[%s1355 + $0x90] sm:$0xff]
        %v1369 = vld [vmem:[%s1355 + $0x98] sm:$0xff]
        %v1370 = vld [vmem:[%s1355 + $0xa8] sm:$0xff]
        %v1371 = vld [vmem:[%s1355 + $0xb0] sm:$0xff]
        %v1372 = vld [vmem:[%s1355 + $0xc0] sm:$0xff]
        %v1373 = vld [vmem:[%s1355 + $0xc8] sm:$0xff]
        %v1374 = vld [vmem:[%s1355 + $0xd8] sm:$0xff]
        %v1375 = vld [vmem:[%s1355 + $0xe0] sm:$0xff]
        %v1376 = vld [vmem:[%s1355 + $0xf0] sm:$0xff]
        %v1377 = vld [vmem:[%s1355 + $0xf8] sm:$0xff]
        %v1378 = vld [vmem:[%s1355 + $0x108] sm:$0xff]
        %v1379 = vld [vmem:[%s1355 + $0x110] sm:$0xff]
        %v1380 = vld [vmem:[%s1355 + $0x120] sm:$0xff]
        %v1381 = vld [vmem:[%s1355 + $0x128] sm:$0xff]
        %v1382 = vld [vmem:[%s1355 + $0x138] sm:$0xff]
        %v1383 = vld [vmem:[%s1355 + $0x140] sm:$0xff]
        %v1384 = vld [vmem:[%s1355 + $0x150] sm:$0xff]
        %v1385 = vld [vmem:[%s1355 + $0x158] sm:$0xff]
        %v1386 = vld [vmem:[%s1355 + $0x168] sm:$0xff]
        %v1387 = vld [vmem:[%s1355 + $0x170] sm:$0xff]
        %s1388 = scalar_lea.vmem %s248, 768
        %v1389 = vld [vmem:[%s1388] sm:$0xff]
        %v1390 = vld [vmem:[%s1388 + $0x8] sm:$0xff]
        %v1391 = vld [vmem:[%s1388 + $0x10] sm:$0xff]
        %v1392 = vld [vmem:[%s1388 + $0x18] sm:$0xff]
        %v1393 = vld [vmem:[%s1388 + $0x20] sm:$0xff]
        %v1394 = vld [vmem:[%s1388 + $0x28] sm:$0xff]
        %v1395 = vld [vmem:[%s1388 + $0x30] sm:$0xff]
        %v1396 = vld [vmem:[%s1388 + $0x38] sm:$0xff]
        %v1397 = vld [vmem:[%s1388 + $0x40] sm:$0xff]
        %v1398 = vld [vmem:[%s1388 + $0x48] sm:$0xff]
        %v1399 = vld [vmem:[%s1388 + $0x50] sm:$0xff]
        %v1400 = vld [vmem:[%s1388 + $0x58] sm:$0xff]
        %v1401 = vld [vmem:[%s1388 + $0x60] sm:$0xff]
        %v1402 = vld [vmem:[%s1388 + $0x68] sm:$0xff]
        %v1403 = vld [vmem:[%s1388 + $0x70] sm:$0xff]
        %v1404 = vld [vmem:[%s1388 + $0x78] sm:$0xff]
        %1405 = vmatpush.msra.mxu0 %v1404
        %1406 = vmatpush.msra.mxu0 %v1403
        %1407 = vmatpush.msra.mxu0 %v1402
        %1408 = vmatpush.msra.mxu0 %v1401
        %1409 = vmatpush.msra.mxu0 %v1400
        %1410 = vmatpush.msra.mxu0 %v1399
        %1411 = vmatpush.msra.mxu0 %v1398
        %1412 = vmatpush.msra.mxu0 %v1397
        %1413 = vmatpush.msra.mxu0 %v1396
        %1414 = vmatpush.msra.mxu0 %v1395
        %1415 = vmatpush.msra.mxu0 %v1394
        %1416 = vmatpush.msra.mxu0 %v1393
        %1417 = vmatpush.msra.mxu0 %v1392
        %1418 = vmatpush.msra.mxu0 %v1391
        %1419 = vmatpush.msra.mxu0 %v1390
        %1420 = vmatpush.msra.mxu0 %v1389
        %1421 = vmatmul.f32.gmra.mxu0 %v1356
        %v1422 = vpop.f32.mrf.mxu0
        %v1423 = vadd.f32 0.0, %v1422
        %1424 = vmatmul.f32.gmra.mxu0 %v1357
        %v1425 = vpop.f32.mrf.mxu0
        %v1426 = vadd.f32 0.0, %v1425
        %1427 = vmatmul.f32.gmra.mxu0 %v1358
        %v1428 = vpop.f32.mrf.mxu0
        %v1429 = vadd.f32 0.0, %v1428
        %1430 = vmatmul.f32.gmra.mxu0 %v1359
        %v1431 = vpop.f32.mrf.mxu0
        %v1432 = vadd.f32 0.0, %v1431
        %1433 = vmatmul.f32.gmra.mxu0 %v1360
        %v1434 = vpop.f32.mrf.mxu0
        %v1435 = vadd.f32 0.0, %v1434
        %1436 = vmatmul.f32.gmra.mxu0 %v1361
        %v1437 = vpop.f32.mrf.mxu0
        %v1438 = vadd.f32 0.0, %v1437
        %1439 = vmatmul.f32.gmra.mxu0 %v1362
        %v1440 = vpop.f32.mrf.mxu0
        %v1441 = vadd.f32 0.0, %v1440
        %1442 = vmatmul.f32.gmra.mxu0 %v1363
        %v1443 = vpop.f32.mrf.mxu0
        %v1444 = vadd.f32 0.0, %v1443
        %1445 = vmatmul.f32.gmra.mxu0 %v1364
        %v1446 = vpop.f32.mrf.mxu0
        %v1447 = vadd.f32 0.0, %v1446
        %1448 = vmatmul.f32.gmra.mxu0 %v1365
        %v1449 = vpop.f32.mrf.mxu0
        %v1450 = vadd.f32 0.0, %v1449
        %1451 = vmatmul.f32.gmra.mxu0 %v1366
        %v1452 = vpop.f32.mrf.mxu0
        %v1453 = vadd.f32 0.0, %v1452
        %1454 = vmatmul.f32.gmra.mxu0 %v1367
        %v1455 = vpop.f32.mrf.mxu0
        %v1456 = vadd.f32 0.0, %v1455
        %1457 = vmatmul.f32.gmra.mxu0 %v1368
        %v1458 = vpop.f32.mrf.mxu0
        %v1459 = vadd.f32 0.0, %v1458
        %1460 = vmatmul.f32.gmra.mxu0 %v1369
        %v1461 = vpop.f32.mrf.mxu0
        %v1462 = vadd.f32 0.0, %v1461
        %1463 = vmatmul.f32.gmra.mxu0 %v1370
        %v1464 = vpop.f32.mrf.mxu0
        %v1465 = vadd.f32 0.0, %v1464
        %1466 = vmatmul.f32.gmra.mxu0 %v1371
        %v1467 = vpop.f32.mrf.mxu0
        %v1468 = vadd.f32 0.0, %v1467
        %1469 = vmatmul.f32.gmra.mxu0 %v1372
        %v1470 = vpop.f32.mrf.mxu0
        %v1471 = vadd.f32 0.0, %v1470
        %1472 = vmatmul.f32.gmra.mxu0 %v1373
        %v1473 = vpop.f32.mrf.mxu0
        %v1474 = vadd.f32 0.0, %v1473
        %1475 = vmatmul.f32.gmra.mxu0 %v1374
        %v1476 = vpop.f32.mrf.mxu0
        %v1477 = vadd.f32 0.0, %v1476
        %1478 = vmatmul.f32.gmra.mxu0 %v1375
        %v1479 = vpop.f32.mrf.mxu0
        %v1480 = vadd.f32 0.0, %v1479
        %1481 = vmatmul.f32.gmra.mxu0 %v1376
        %v1482 = vpop.f32.mrf.mxu0
        %v1483 = vadd.f32 0.0, %v1482
        %1484 = vmatmul.f32.gmra.mxu0 %v1377
        %v1485 = vpop.f32.mrf.mxu0
        %v1486 = vadd.f32 0.0, %v1485
        %1487 = vmatmul.f32.gmra.mxu0 %v1378
        %v1488 = vpop.f32.mrf.mxu0
        %v1489 = vadd.f32 0.0, %v1488
        %1490 = vmatmul.f32.gmra.mxu0 %v1379
        %v1491 = vpop.f32.mrf.mxu0
        %v1492 = vadd.f32 0.0, %v1491
        %1493 = vmatmul.f32.gmra.mxu0 %v1380
        %v1494 = vpop.f32.mrf.mxu0
        %v1495 = vadd.f32 0.0, %v1494
        %1496 = vmatmul.f32.gmra.mxu0 %v1381
        %v1497 = vpop.f32.mrf.mxu0
        %v1498 = vadd.f32 0.0, %v1497
        %1499 = vmatmul.f32.gmra.mxu0 %v1382
        %v1500 = vpop.f32.mrf.mxu0
        %v1501 = vadd.f32 0.0, %v1500
        %1502 = vmatmul.f32.gmra.mxu0 %v1383
        %v1503 = vpop.f32.mrf.mxu0
        %v1504 = vadd.f32 0.0, %v1503
        %1505 = vmatmul.f32.gmra.mxu0 %v1384
        %v1506 = vpop.f32.mrf.mxu0
        %v1507 = vadd.f32 0.0, %v1506
        %1508 = vmatmul.f32.gmra.mxu0 %v1385
        %v1509 = vpop.f32.mrf.mxu0
        %v1510 = vadd.f32 0.0, %v1509
        %1511 = vmatmul.f32.gmra.mxu0 %v1386
        %v1512 = vpop.f32.mrf.mxu0
        %v1513 = vadd.f32 0.0, %v1512
        %1514 = vmatmul.f32.gmra.mxu0 %v1387
        %v1515 = vpop.f32.mrf.mxu0
        %v1516 = vadd.f32 0.0, %v1515
        %1517 = vdwg.mxu0
        %v1518 = vadd.f32 %v1323, %v1423
        %v1519 = vadd.f32 %v1324, %v1426
        %v1520 = vadd.f32 %v1325, %v1429
        %v1521 = vadd.f32 %v1326, %v1432
        %v1522 = vadd.f32 %v1327, %v1435
        %v1523 = vadd.f32 %v1328, %v1438
        %v1524 = vadd.f32 %v1329, %v1441
        %v1525 = vadd.f32 %v1330, %v1444
        %v1526 = vadd.f32 %v1331, %v1447
        %v1527 = vadd.f32 %v1332, %v1450
        %v1528 = vadd.f32 %v1333, %v1453
        %v1529 = vadd.f32 %v1334, %v1456
        %v1530 = vadd.f32 %v1335, %v1459
        %v1531 = vadd.f32 %v1336, %v1462
        %v1532 = vadd.f32 %v1337, %v1465
        %v1533 = vadd.f32 %v1338, %v1468
        %v1534 = vadd.f32 %v1339, %v1471
        %v1535 = vadd.f32 %v1340, %v1474
        %v1536 = vadd.f32 %v1341, %v1477
        %v1537 = vadd.f32 %v1342, %v1480
        %v1538 = vadd.f32 %v1343, %v1483
        %v1539 = vadd.f32 %v1344, %v1486
        %v1540 = vadd.f32 %v1345, %v1489
        %v1541 = vadd.f32 %v1346, %v1492
        %v1542 = vadd.f32 %v1347, %v1495
        %v1543 = vadd.f32 %v1348, %v1498
        %v1544 = vadd.f32 %v1349, %v1501
        %v1545 = vadd.f32 %v1350, %v1504
        %v1546 = vadd.f32 %v1351, %v1507
        %v1547 = vadd.f32 %v1352, %v1510
        %v1548 = vadd.f32 %v1353, %v1513
        %v1549 = vadd.f32 %v1354, %v1516
        %v1550 = vld [vmem:[%s1355 + $0x1] sm:$0xff]
        %v1551 = vld [vmem:[%s1355 + $0x9] sm:$0xff]
        %v1552 = vld [vmem:[%s1355 + $0x19] sm:$0xff]
        %v1553 = vld [vmem:[%s1355 + $0x21] sm:$0xff]
        %v1554 = vld [vmem:[%s1355 + $0x31] sm:$0xff]
        %v1555 = vld [vmem:[%s1355 + $0x39] sm:$0xff]
        %v1556 = vld [vmem:[%s1355 + $0x49] sm:$0xff]
        %v1557 = vld [vmem:[%s1355 + $0x51] sm:$0xff]
        %v1558 = vld [vmem:[%s1355 + $0x61] sm:$0xff]
        %v1559 = vld [vmem:[%s1355 + $0x69] sm:$0xff]
        %v1560 = vld [vmem:[%s1355 + $0x79] sm:$0xff]
        %v1561 = vld [vmem:[%s1355 + $0x81] sm:$0xff]
        %v1562 = vld [vmem:[%s1355 + $0x91] sm:$0xff]
        %v1563 = vld [vmem:[%s1355 + $0x99] sm:$0xff]
        %v1564 = vld [vmem:[%s1355 + $0xa9] sm:$0xff]
        %v1565 = vld [vmem:[%s1355 + $0xb1] sm:$0xff]
        %v1566 = vld [vmem:[%s1355 + $0xc1] sm:$0xff]
        %v1567 = vld [vmem:[%s1355 + $0xc9] sm:$0xff]
        %v1568 = vld [vmem:[%s1355 + $0xd9] sm:$0xff]
        %v1569 = vld [vmem:[%s1355 + $0xe1] sm:$0xff]
        %v1570 = vld [vmem:[%s1355 + $0xf1] sm:$0xff]
        %v1571 = vld [vmem:[%s1355 + $0xf9] sm:$0xff]
        %v1572 = vld [vmem:[%s1355 + $0x109] sm:$0xff]
        %v1573 = vld [vmem:[%s1355 + $0x111] sm:$0xff]
        %v1574 = vld [vmem:[%s1355 + $0x121] sm:$0xff]
        %v1575 = vld [vmem:[%s1355 + $0x129] sm:$0xff]
        %v1576 = vld [vmem:[%s1355 + $0x139] sm:$0xff]
        %v1577 = vld [vmem:[%s1355 + $0x141] sm:$0xff]
        %v1578 = vld [vmem:[%s1355 + $0x151] sm:$0xff]
        %v1579 = vld [vmem:[%s1355 + $0x159] sm:$0xff]
        %v1580 = vld [vmem:[%s1355 + $0x169] sm:$0xff]
        %v1581 = vld [vmem:[%s1355 + $0x171] sm:$0xff]
        %s1582 = scalar_lea.vmem %s248, 896
        %v1583 = vld [vmem:[%s1582] sm:$0xff]
        %v1584 = vld [vmem:[%s1582 + $0x8] sm:$0xff]
        %v1585 = vld [vmem:[%s1582 + $0x10] sm:$0xff]
        %v1586 = vld [vmem:[%s1582 + $0x18] sm:$0xff]
        %v1587 = vld [vmem:[%s1582 + $0x20] sm:$0xff]
        %v1588 = vld [vmem:[%s1582 + $0x28] sm:$0xff]
        %v1589 = vld [vmem:[%s1582 + $0x30] sm:$0xff]
        %v1590 = vld [vmem:[%s1582 + $0x38] sm:$0xff]
        %v1591 = vld [vmem:[%s1582 + $0x40] sm:$0xff]
        %v1592 = vld [vmem:[%s1582 + $0x48] sm:$0xff]
        %v1593 = vld [vmem:[%s1582 + $0x50] sm:$0xff]
        %v1594 = vld [vmem:[%s1582 + $0x58] sm:$0xff]
        %v1595 = vld [vmem:[%s1582 + $0x60] sm:$0xff]
        %v1596 = vld [vmem:[%s1582 + $0x68] sm:$0xff]
        %v1597 = vld [vmem:[%s1582 + $0x70] sm:$0xff]
        %v1598 = vld [vmem:[%s1582 + $0x78] sm:$0xff]
        %1599 = vmatpush.msra.mxu0 %v1598
        %1600 = vmatpush.msra.mxu0 %v1597
        %1601 = vmatpush.msra.mxu0 %v1596
        %1602 = vmatpush.msra.mxu0 %v1595
        %1603 = vmatpush.msra.mxu0 %v1594
        %1604 = vmatpush.msra.mxu0 %v1593
        %1605 = vmatpush.msra.mxu0 %v1592
        %1606 = vmatpush.msra.mxu0 %v1591
        %1607 = vmatpush.msra.mxu0 %v1590
        %1608 = vmatpush.msra.mxu0 %v1589
        %1609 = vmatpush.msra.mxu0 %v1588
        %1610 = vmatpush.msra.mxu0 %v1587
        %1611 = vmatpush.msra.mxu0 %v1586
        %1612 = vmatpush.msra.mxu0 %v1585
        %1613 = vmatpush.msra.mxu0 %v1584
        %1614 = vmatpush.msra.mxu0 %v1583
        %1615 = vmatmul.f32.gmra.mxu0 %v1550
        %v1616 = vpop.f32.mrf.mxu0
        %v1617 = vadd.f32 0.0, %v1616
        %1618 = vmatmul.f32.gmra.mxu0 %v1551
        %v1619 = vpop.f32.mrf.mxu0
        %v1620 = vadd.f32 0.0, %v1619
        %1621 = vmatmul.f32.gmra.mxu0 %v1552
        %v1622 = vpop.f32.mrf.mxu0
        %v1623 = vadd.f32 0.0, %v1622
        %1624 = vmatmul.f32.gmra.mxu0 %v1553
        %v1625 = vpop.f32.mrf.mxu0
        %v1626 = vadd.f32 0.0, %v1625
        %1627 = vmatmul.f32.gmra.mxu0 %v1554
        %v1628 = vpop.f32.mrf.mxu0
        %v1629 = vadd.f32 0.0, %v1628
        %1630 = vmatmul.f32.gmra.mxu0 %v1555
        %v1631 = vpop.f32.mrf.mxu0
        %v1632 = vadd.f32 0.0, %v1631
        %1633 = vmatmul.f32.gmra.mxu0 %v1556
        %v1634 = vpop.f32.mrf.mxu0
        %v1635 = vadd.f32 0.0, %v1634
        %1636 = vmatmul.f32.gmra.mxu0 %v1557
        %v1637 = vpop.f32.mrf.mxu0
        %v1638 = vadd.f32 0.0, %v1637
        %1639 = vmatmul.f32.gmra.mxu0 %v1558
        %v1640 = vpop.f32.mrf.mxu0
        %v1641 = vadd.f32 0.0, %v1640
        %1642 = vmatmul.f32.gmra.mxu0 %v1559
        %v1643 = vpop.f32.mrf.mxu0
        %v1644 = vadd.f32 0.0, %v1643
        %1645 = vmatmul.f32.gmra.mxu0 %v1560
        %v1646 = vpop.f32.mrf.mxu0
        %v1647 = vadd.f32 0.0, %v1646
        %1648 = vmatmul.f32.gmra.mxu0 %v1561
        %v1649 = vpop.f32.mrf.mxu0
        %v1650 = vadd.f32 0.0, %v1649
        %1651 = vmatmul.f32.gmra.mxu0 %v1562
        %v1652 = vpop.f32.mrf.mxu0
        %v1653 = vadd.f32 0.0, %v1652
        %1654 = vmatmul.f32.gmra.mxu0 %v1563
        %v1655 = vpop.f32.mrf.mxu0
        %v1656 = vadd.f32 0.0, %v1655
        %1657 = vmatmul.f32.gmra.mxu0 %v1564
        %v1658 = vpop.f32.mrf.mxu0
        %v1659 = vadd.f32 0.0, %v1658
        %1660 = vmatmul.f32.gmra.mxu0 %v1565
        %v1661 = vpop.f32.mrf.mxu0
        %v1662 = vadd.f32 0.0, %v1661
        %1663 = vmatmul.f32.gmra.mxu0 %v1566
        %v1664 = vpop.f32.mrf.mxu0
        %v1665 = vadd.f32 0.0, %v1664
        %1666 = vmatmul.f32.gmra.mxu0 %v1567
        %v1667 = vpop.f32.mrf.mxu0
        %v1668 = vadd.f32 0.0, %v1667
        %1669 = vmatmul.f32.gmra.mxu0 %v1568
        %v1670 = vpop.f32.mrf.mxu0
        %v1671 = vadd.f32 0.0, %v1670
        %1672 = vmatmul.f32.gmra.mxu0 %v1569
        %v1673 = vpop.f32.mrf.mxu0
        %v1674 = vadd.f32 0.0, %v1673
        %1675 = vmatmul.f32.gmra.mxu0 %v1570
        %v1676 = vpop.f32.mrf.mxu0
        %v1677 = vadd.f32 0.0, %v1676
        %1678 = vmatmul.f32.gmra.mxu0 %v1571
        %v1679 = vpop.f32.mrf.mxu0
        %v1680 = vadd.f32 0.0, %v1679
        %1681 = vmatmul.f32.gmra.mxu0 %v1572
        %v1682 = vpop.f32.mrf.mxu0
        %v1683 = vadd.f32 0.0, %v1682
        %1684 = vmatmul.f32.gmra.mxu0 %v1573
        %v1685 = vpop.f32.mrf.mxu0
        %v1686 = vadd.f32 0.0, %v1685
        %1687 = vmatmul.f32.gmra.mxu0 %v1574
        %v1688 = vpop.f32.mrf.mxu0
        %v1689 = vadd.f32 0.0, %v1688
        %1690 = vmatmul.f32.gmra.mxu0 %v1575
        %v1691 = vpop.f32.mrf.mxu0
        %v1692 = vadd.f32 0.0, %v1691
        %1693 = vmatmul.f32.gmra.mxu0 %v1576
        %v1694 = vpop.f32.mrf.mxu0
        %v1695 = vadd.f32 0.0, %v1694
        %1696 = vmatmul.f32.gmra.mxu0 %v1577
        %v1697 = vpop.f32.mrf.mxu0
        %v1698 = vadd.f32 0.0, %v1697
        %1699 = vmatmul.f32.gmra.mxu0 %v1578
        %v1700 = vpop.f32.mrf.mxu0
        %v1701 = vadd.f32 0.0, %v1700
        %1702 = vmatmul.f32.gmra.mxu0 %v1579
        %v1703 = vpop.f32.mrf.mxu0
        %v1704 = vadd.f32 0.0, %v1703
        %1705 = vmatmul.f32.gmra.mxu0 %v1580
        %v1706 = vpop.f32.mrf.mxu0
        %v1707 = vadd.f32 0.0, %v1706
        %1708 = vmatmul.f32.gmra.mxu0 %v1581
        %v1709 = vpop.f32.mrf.mxu0
        %v1710 = vadd.f32 0.0, %v1709
        %1711 = vdwg.mxu0
        %v1712 = vadd.f32 %v1518, %v1617
        %v1713 = vadd.f32 %v1519, %v1620
        %v1714 = vadd.f32 %v1520, %v1623
        %v1715 = vadd.f32 %v1521, %v1626
        %v1716 = vadd.f32 %v1522, %v1629
        %v1717 = vadd.f32 %v1523, %v1632
        %v1718 = vadd.f32 %v1524, %v1635
        %v1719 = vadd.f32 %v1525, %v1638
        %v1720 = vadd.f32 %v1526, %v1641
        %v1721 = vadd.f32 %v1527, %v1644
        %v1722 = vadd.f32 %v1528, %v1647
        %v1723 = vadd.f32 %v1529, %v1650
        %v1724 = vadd.f32 %v1530, %v1653
        %v1725 = vadd.f32 %v1531, %v1656
        %v1726 = vadd.f32 %v1532, %v1659
        %v1727 = vadd.f32 %v1533, %v1662
        %v1728 = vadd.f32 %v1534, %v1665
        %v1729 = vadd.f32 %v1535, %v1668
        %v1730 = vadd.f32 %v1536, %v1671
        %v1731 = vadd.f32 %v1537, %v1674
        %v1732 = vadd.f32 %v1538, %v1677
        %v1733 = vadd.f32 %v1539, %v1680
        %v1734 = vadd.f32 %v1540, %v1683
        %v1735 = vadd.f32 %v1541, %v1686
        %v1736 = vadd.f32 %v1542, %v1689
        %v1737 = vadd.f32 %v1543, %v1692
        %v1738 = vadd.f32 %v1544, %v1695
        %v1739 = vadd.f32 %v1545, %v1698
        %v1740 = vadd.f32 %v1546, %v1701
        %v1741 = vadd.f32 %v1547, %v1704
        %v1742 = vadd.f32 %v1548, %v1707
        %v1743 = vadd.f32 %v1549, %v1710
        %v1744 = vld [vmem:[%s1355 + $0x2] sm:$0xff]
        %v1745 = vld [vmem:[%s1355 + $0xa] sm:$0xff]
        %v1746 = vld [vmem:[%s1355 + $0x1a] sm:$0xff]
        %v1747 = vld [vmem:[%s1355 + $0x22] sm:$0xff]
        %v1748 = vld [vmem:[%s1355 + $0x32] sm:$0xff]
        %v1749 = vld [vmem:[%s1355 + $0x3a] sm:$0xff]
        %v1750 = vld [vmem:[%s1355 + $0x4a] sm:$0xff]
        %v1751 = vld [vmem:[%s1355 + $0x52] sm:$0xff]
        %v1752 = vld [vmem:[%s1355 + $0x62] sm:$0xff]
        %v1753 = vld [vmem:[%s1355 + $0x6a] sm:$0xff]
        %v1754 = vld [vmem:[%s1355 + $0x7a] sm:$0xff]
        %v1755 = vld [vmem:[%s1355 + $0x82] sm:$0xff]
        %v1756 = vld [vmem:[%s1355 + $0x92] sm:$0xff]
        %v1757 = vld [vmem:[%s1355 + $0x9a] sm:$0xff]
        %v1758 = vld [vmem:[%s1355 + $0xaa] sm:$0xff]
        %v1759 = vld [vmem:[%s1355 + $0xb2] sm:$0xff]
        %v1760 = vld [vmem:[%s1355 + $0xc2] sm:$0xff]
        %v1761 = vld [vmem:[%s1355 + $0xca] sm:$0xff]
        %v1762 = vld [vmem:[%s1355 + $0xda] sm:$0xff]
        %v1763 = vld [vmem:[%s1355 + $0xe2] sm:$0xff]
        %v1764 = vld [vmem:[%s1355 + $0xf2] sm:$0xff]
        %v1765 = vld [vmem:[%s1355 + $0xfa] sm:$0xff]
        %v1766 = vld [vmem:[%s1355 + $0x10a] sm:$0xff]
        %v1767 = vld [vmem:[%s1355 + $0x112] sm:$0xff]
        %v1768 = vld [vmem:[%s1355 + $0x122] sm:$0xff]
        %v1769 = vld [vmem:[%s1355 + $0x12a] sm:$0xff]
        %v1770 = vld [vmem:[%s1355 + $0x13a] sm:$0xff]
        %v1771 = vld [vmem:[%s1355 + $0x142] sm:$0xff]
        %v1772 = vld [vmem:[%s1355 + $0x152] sm:$0xff]
        %v1773 = vld [vmem:[%s1355 + $0x15a] sm:$0xff]
        %v1774 = vld [vmem:[%s1355 + $0x16a] sm:$0xff]
        %v1775 = vld [vmem:[%s1355 + $0x172] sm:$0xff]
        %s1776 = scalar_lea.vmem %s248, 1024
        %v1777 = vld [vmem:[%s1776] sm:$0xff]
        %v1778 = vld [vmem:[%s1776 + $0x8] sm:$0xff]
        %v1779 = vld [vmem:[%s1776 + $0x10] sm:$0xff]
        %v1780 = vld [vmem:[%s1776 + $0x18] sm:$0xff]
        %v1781 = vld [vmem:[%s1776 + $0x20] sm:$0xff]
        %v1782 = vld [vmem:[%s1776 + $0x28] sm:$0xff]
        %v1783 = vld [vmem:[%s1776 + $0x30] sm:$0xff]
        %v1784 = vld [vmem:[%s1776 + $0x38] sm:$0xff]
        %v1785 = vld [vmem:[%s1776 + $0x40] sm:$0xff]
        %v1786 = vld [vmem:[%s1776 + $0x48] sm:$0xff]
        %v1787 = vld [vmem:[%s1776 + $0x50] sm:$0xff]
        %v1788 = vld [vmem:[%s1776 + $0x58] sm:$0xff]
        %v1789 = vld [vmem:[%s1776 + $0x60] sm:$0xff]
        %v1790 = vld [vmem:[%s1776 + $0x68] sm:$0xff]
        %v1791 = vld [vmem:[%s1776 + $0x70] sm:$0xff]
        %v1792 = vld [vmem:[%s1776 + $0x78] sm:$0xff]
        %1793 = vmatpush.msra.mxu0 %v1792
        %1794 = vmatpush.msra.mxu0 %v1791
        %1795 = vmatpush.msra.mxu0 %v1790
        %1796 = vmatpush.msra.mxu0 %v1789
        %1797 = vmatpush.msra.mxu0 %v1788
        %1798 = vmatpush.msra.mxu0 %v1787
        %1799 = vmatpush.msra.mxu0 %v1786
        %1800 = vmatpush.msra.mxu0 %v1785
        %1801 = vmatpush.msra.mxu0 %v1784
        %1802 = vmatpush.msra.mxu0 %v1783
        %1803 = vmatpush.msra.mxu0 %v1782
        %1804 = vmatpush.msra.mxu0 %v1781
        %1805 = vmatpush.msra.mxu0 %v1780
        %1806 = vmatpush.msra.mxu0 %v1779
        %1807 = vmatpush.msra.mxu0 %v1778
        %1808 = vmatpush.msra.mxu0 %v1777
        %1809 = vmatmul.f32.gmra.mxu0 %v1744
        %v1810 = vpop.f32.mrf.mxu0
        %v1811 = vadd.f32 0.0, %v1810
        %1812 = vmatmul.f32.gmra.mxu0 %v1745
        %v1813 = vpop.f32.mrf.mxu0
        %v1814 = vadd.f32 0.0, %v1813
        %1815 = vmatmul.f32.gmra.mxu0 %v1746
        %v1816 = vpop.f32.mrf.mxu0
        %v1817 = vadd.f32 0.0, %v1816
        %1818 = vmatmul.f32.gmra.mxu0 %v1747
        %v1819 = vpop.f32.mrf.mxu0
        %v1820 = vadd.f32 0.0, %v1819
        %1821 = vmatmul.f32.gmra.mxu0 %v1748
        %v1822 = vpop.f32.mrf.mxu0
        %v1823 = vadd.f32 0.0, %v1822
        %1824 = vmatmul.f32.gmra.mxu0 %v1749
        %v1825 = vpop.f32.mrf.mxu0
        %v1826 = vadd.f32 0.0, %v1825
        %1827 = vmatmul.f32.gmra.mxu0 %v1750
        %v1828 = vpop.f32.mrf.mxu0
        %v1829 = vadd.f32 0.0, %v1828
        %1830 = vmatmul.f32.gmra.mxu0 %v1751
        %v1831 = vpop.f32.mrf.mxu0
        %v1832 = vadd.f32 0.0, %v1831
        %1833 = vmatmul.f32.gmra.mxu0 %v1752
        %v1834 = vpop.f32.mrf.mxu0
        %v1835 = vadd.f32 0.0, %v1834
        %1836 = vmatmul.f32.gmra.mxu0 %v1753
        %v1837 = vpop.f32.mrf.mxu0
        %v1838 = vadd.f32 0.0, %v1837
        %1839 = vmatmul.f32.gmra.mxu0 %v1754
        %v1840 = vpop.f32.mrf.mxu0
        %v1841 = vadd.f32 0.0, %v1840
        %1842 = vmatmul.f32.gmra.mxu0 %v1755
        %v1843 = vpop.f32.mrf.mxu0
        %v1844 = vadd.f32 0.0, %v1843
        %1845 = vmatmul.f32.gmra.mxu0 %v1756
        %v1846 = vpop.f32.mrf.mxu0
        %v1847 = vadd.f32 0.0, %v1846
        %1848 = vmatmul.f32.gmra.mxu0 %v1757
        %v1849 = vpop.f32.mrf.mxu0
        %v1850 = vadd.f32 0.0, %v1849
        %1851 = vmatmul.f32.gmra.mxu0 %v1758
        %v1852 = vpop.f32.mrf.mxu0
        %v1853 = vadd.f32 0.0, %v1852
        %1854 = vmatmul.f32.gmra.mxu0 %v1759
        %v1855 = vpop.f32.mrf.mxu0
        %v1856 = vadd.f32 0.0, %v1855
        %1857 = vmatmul.f32.gmra.mxu0 %v1760
        %v1858 = vpop.f32.mrf.mxu0
        %v1859 = vadd.f32 0.0, %v1858
        %1860 = vmatmul.f32.gmra.mxu0 %v1761
        %v1861 = vpop.f32.mrf.mxu0
        %v1862 = vadd.f32 0.0, %v1861
        %1863 = vmatmul.f32.gmra.mxu0 %v1762
        %v1864 = vpop.f32.mrf.mxu0
        %v1865 = vadd.f32 0.0, %v1864
        %1866 = vmatmul.f32.gmra.mxu0 %v1763
        %v1867 = vpop.f32.mrf.mxu0
        %v1868 = vadd.f32 0.0, %v1867
        %1869 = vmatmul.f32.gmra.mxu0 %v1764
        %v1870 = vpop.f32.mrf.mxu0
        %v1871 = vadd.f32 0.0, %v1870
        %1872 = vmatmul.f32.gmra.mxu0 %v1765
        %v1873 = vpop.f32.mrf.mxu0
        %v1874 = vadd.f32 0.0, %v1873
        %1875 = vmatmul.f32.gmra.mxu0 %v1766
        %v1876 = vpop.f32.mrf.mxu0
        %v1877 = vadd.f32 0.0, %v1876
        %1878 = vmatmul.f32.gmra.mxu0 %v1767
        %v1879 = vpop.f32.mrf.mxu0
        %v1880 = vadd.f32 0.0, %v1879
        %1881 = vmatmul.f32.gmra.mxu0 %v1768
        %v1882 = vpop.f32.mrf.mxu0
        %v1883 = vadd.f32 0.0, %v1882
        %1884 = vmatmul.f32.gmra.mxu0 %v1769
        %v1885 = vpop.f32.mrf.mxu0
        %v1886 = vadd.f32 0.0, %v1885
        %1887 = vmatmul.f32.gmra.mxu0 %v1770
        %v1888 = vpop.f32.mrf.mxu0
        %v1889 = vadd.f32 0.0, %v1888
        %1890 = vmatmul.f32.gmra.mxu0 %v1771
        %v1891 = vpop.f32.mrf.mxu0
        %v1892 = vadd.f32 0.0, %v1891
        %1893 = vmatmul.f32.gmra.mxu0 %v1772
        %v1894 = vpop.f32.mrf.mxu0
        %v1895 = vadd.f32 0.0, %v1894
        %1896 = vmatmul.f32.gmra.mxu0 %v1773
        %v1897 = vpop.f32.mrf.mxu0
        %v1898 = vadd.f32 0.0, %v1897
        %1899 = vmatmul.f32.gmra.mxu0 %v1774
        %v1900 = vpop.f32.mrf.mxu0
        %v1901 = vadd.f32 0.0, %v1900
        %1902 = vmatmul.f32.gmra.mxu0 %v1775
        %v1903 = vpop.f32.mrf.mxu0
        %v1904 = vadd.f32 0.0, %v1903
        %1905 = vdwg.mxu0
        %v1906 = vadd.f32 %v1712, %v1811
        %v1907 = vadd.f32 %v1713, %v1814
        %v1908 = vadd.f32 %v1714, %v1817
        %v1909 = vadd.f32 %v1715, %v1820
        %v1910 = vadd.f32 %v1716, %v1823
        %v1911 = vadd.f32 %v1717, %v1826
        %v1912 = vadd.f32 %v1718, %v1829
        %v1913 = vadd.f32 %v1719, %v1832
        %v1914 = vadd.f32 %v1720, %v1835
        %v1915 = vadd.f32 %v1721, %v1838
        %v1916 = vadd.f32 %v1722, %v1841
        %v1917 = vadd.f32 %v1723, %v1844
        %v1918 = vadd.f32 %v1724, %v1847
        %v1919 = vadd.f32 %v1725, %v1850
        %v1920 = vadd.f32 %v1726, %v1853
        %v1921 = vadd.f32 %v1727, %v1856
        %v1922 = vadd.f32 %v1728, %v1859
        %v1923 = vadd.f32 %v1729, %v1862
        %v1924 = vadd.f32 %v1730, %v1865
        %v1925 = vadd.f32 %v1731, %v1868
        %v1926 = vadd.f32 %v1732, %v1871
        %v1927 = vadd.f32 %v1733, %v1874
        %v1928 = vadd.f32 %v1734, %v1877
        %v1929 = vadd.f32 %v1735, %v1880
        %v1930 = vadd.f32 %v1736, %v1883
        %v1931 = vadd.f32 %v1737, %v1886
        %v1932 = vadd.f32 %v1738, %v1889
        %v1933 = vadd.f32 %v1739, %v1892
        %v1934 = vadd.f32 %v1740, %v1895
        %v1935 = vadd.f32 %v1741, %v1898
        %v1936 = vadd.f32 %v1742, %v1901
        %v1937 = vadd.f32 %v1743, %v1904
        %v1938 = vld [vmem:[%s251] sm:$0x1]
        %v1940 = vperm.slane %v1938, 0
        %v1942 = vmul.f32 %v1906, %v1940
        %v1943 = vmul.f32 %v1907, %v1940
        %v1944 = vmul.f32 %v1908, %v1940
        %v1945 = vmul.f32 %v1909, %v1940
        %v1946 = vmul.f32 %v1910, %v1940
        %v1947 = vmul.f32 %v1911, %v1940
        %v1948 = vmul.f32 %v1912, %v1940
        %v1949 = vmul.f32 %v1913, %v1940
        %v1950 = vmul.f32 %v1914, %v1940
        %v1951 = vmul.f32 %v1915, %v1940
        %v1952 = vmul.f32 %v1916, %v1940
        %v1953 = vmul.f32 %v1917, %v1940
        %v1954 = vmul.f32 %v1918, %v1940
        %v1955 = vmul.f32 %v1919, %v1940
        %v1956 = vmul.f32 %v1920, %v1940
        %v1957 = vmul.f32 %v1921, %v1940
        %v1958 = vmul.f32 %v1922, %v1940
        %v1959 = vmul.f32 %v1923, %v1940
        %v1960 = vmul.f32 %v1924, %v1940
        %v1961 = vmul.f32 %v1925, %v1940
        %v1962 = vmul.f32 %v1926, %v1940
        %v1963 = vmul.f32 %v1927, %v1940
        %v1964 = vmul.f32 %v1928, %v1940
        %v1965 = vmul.f32 %v1929, %v1940
        %v1966 = vmul.f32 %v1930, %v1940
        %v1967 = vmul.f32 %v1931, %v1940
        %v1968 = vmul.f32 %v1932, %v1940
        %v1969 = vmul.f32 %v1933, %v1940
        %v1970 = vmul.f32 %v1934, %v1940
        %v1971 = vmul.f32 %v1935, %v1940
        %v1972 = vmul.f32 %v1936, %v1940
        %v1973 = vmul.f32 %v1937, %v1940
        %v1974 = vld [vmem:[%s254] sm:$0x1]
        %v1976 = vperm.slane %v1974, 0
        %v1978 = vadd.f32 %v1942, %v1976
        %v1979 = vadd.f32 %v1943, %v1976
        %v1980 = vadd.f32 %v1944, %v1976
        %v1981 = vadd.f32 %v1945, %v1976
        %v1982 = vadd.f32 %v1946, %v1976
        %v1983 = vadd.f32 %v1947, %v1976
        %v1984 = vadd.f32 %v1948, %v1976
        %v1985 = vadd.f32 %v1949, %v1976
        %v1986 = vadd.f32 %v1950, %v1976
        %v1987 = vadd.f32 %v1951, %v1976
        %v1988 = vadd.f32 %v1952, %v1976
        %v1989 = vadd.f32 %v1953, %v1976
        %v1990 = vadd.f32 %v1954, %v1976
        %v1991 = vadd.f32 %v1955, %v1976
        %v1992 = vadd.f32 %v1956, %v1976
        %v1993 = vadd.f32 %v1957, %v1976
        %v1994 = vadd.f32 %v1958, %v1976
        %v1995 = vadd.f32 %v1959, %v1976
        %v1996 = vadd.f32 %v1960, %v1976
        %v1997 = vadd.f32 %v1961, %v1976
        %v1998 = vadd.f32 %v1962, %v1976
        %v1999 = vadd.f32 %v1963, %v1976
        %v2000 = vadd.f32 %v1964, %v1976
        %v2001 = vadd.f32 %v1965, %v1976
        %v2002 = vadd.f32 %v1966, %v1976
        %v2003 = vadd.f32 %v1967, %v1976
        %v2004 = vadd.f32 %v1968, %v1976
        %v2005 = vadd.f32 %v1969, %v1976
        %v2006 = vadd.f32 %v1970, %v1976
        %v2007 = vadd.f32 %v1971, %v1976
        %v2008 = vadd.f32 %v1972, %v1976
        %v2009 = vadd.f32 %v1973, %v1976
        %v2010 = vmax.f32 %v1978, 0.0
        %v2011 = vmax.f32 %v1979, 0.0
        %v2012 = vmax.f32 %v1980, 0.0
        %v2013 = vmax.f32 %v1981, 0.0
        %v2014 = vmax.f32 %v1982, 0.0
        %v2015 = vmax.f32 %v1983, 0.0
        %v2016 = vmax.f32 %v1984, 0.0
        %v2017 = vmax.f32 %v1985, 0.0
        %v2018 = vmax.f32 %v1986, 0.0
        %v2019 = vmax.f32 %v1987, 0.0
        %v2020 = vmax.f32 %v1988, 0.0
        %v2021 = vmax.f32 %v1989, 0.0
        %v2022 = vmax.f32 %v1990, 0.0
        %v2023 = vmax.f32 %v1991, 0.0
        %v2024 = vmax.f32 %v1992, 0.0
        %v2025 = vmax.f32 %v1993, 0.0
        %v2026 = vmax.f32 %v1994, 0.0
        %v2027 = vmax.f32 %v1995, 0.0
        %v2028 = vmax.f32 %v1996, 0.0
        %v2029 = vmax.f32 %v1997, 0.0
        %v2030 = vmax.f32 %v1998, 0.0
        %v2031 = vmax.f32 %v1999, 0.0
        %v2032 = vmax.f32 %v2000, 0.0
        %v2033 = vmax.f32 %v2001, 0.0
        %v2034 = vmax.f32 %v2002, 0.0
        %v2035 = vmax.f32 %v2003, 0.0
        %v2036 = vmax.f32 %v2004, 0.0
        %v2037 = vmax.f32 %v2005, 0.0
        %v2038 = vmax.f32 %v2006, 0.0
        %v2039 = vmax.f32 %v2007, 0.0
        %v2040 = vmax.f32 %v2008, 0.0
        %v2041 = vmax.f32 %v2009, 0.0
        %2042 = vst [vmem:[%s239] sm:$0xff] %v2010
        %2043 = vst [vmem:[%s239 + $0x8] sm:$0xff] %v2011
        %2044 = vst [vmem:[%s239 + $0x10] sm:$0xff] %v2012
        %2045 = vst [vmem:[%s239 + $0x18] sm:$0xff] %v2013
        %2046 = vst [vmem:[%s239 + $0x20] sm:$0xff] %v2014
        %2047 = vst [vmem:[%s239 + $0x28] sm:$0xff] %v2015
        %2048 = vst [vmem:[%s239 + $0x30] sm:$0xff] %v2016
        %2049 = vst [vmem:[%s239 + $0x38] sm:$0xff] %v2017
        %2050 = vst [vmem:[%s239 + $0x40] sm:$0xff] %v2018
        %2051 = vst [vmem:[%s239 + $0x48] sm:$0xff] %v2019
        %2052 = vst [vmem:[%s239 + $0x50] sm:$0xff] %v2020
        %2053 = vst [vmem:[%s239 + $0x58] sm:$0xff] %v2021
        %2054 = vst [vmem:[%s239 + $0x60] sm:$0xff] %v2022
        %2055 = vst [vmem:[%s239 + $0x68] sm:$0xff] %v2023
        %2056 = vst [vmem:[%s239 + $0x70] sm:$0xff] %v2024
        %2057 = vst [vmem:[%s239 + $0x78] sm:$0xff] %v2025
        %2058 = vst [vmem:[%s239 + $0x80] sm:$0xff] %v2026
        %2059 = vst [vmem:[%s239 + $0x88] sm:$0xff] %v2027
        %2060 = vst [vmem:[%s239 + $0x90] sm:$0xff] %v2028
        %2061 = vst [vmem:[%s239 + $0x98] sm:$0xff] %v2029
        %2062 = vst [vmem:[%s239 + $0xa0] sm:$0xff] %v2030
        %2063 = vst [vmem:[%s239 + $0xa8] sm:$0xff] %v2031
        %2064 = vst [vmem:[%s239 + $0xb0] sm:$0xff] %v2032
        %2065 = vst [vmem:[%s239 + $0xb8] sm:$0xff] %v2033
        %2066 = vst [vmem:[%s239 + $0xc0] sm:$0xff] %v2034
        %2067 = vst [vmem:[%s239 + $0xc8] sm:$0xff] %v2035
        %2068 = vst [vmem:[%s239 + $0xd0] sm:$0xff] %v2036
        %2069 = vst [vmem:[%s239 + $0xd8] sm:$0xff] %v2037
        %2070 = vst [vmem:[%s239 + $0xe0] sm:$0xff] %v2038
        %2071 = vst [vmem:[%s239 + $0xe8] sm:$0xff] %v2039
        %2072 = vst [vmem:[%s239 + $0xf0] sm:$0xff] %v2040
        %2073 = vst [vmem:[%s239 + $0xf8] sm:$0xff] %v2041
        %s2074 = sand.u32 %s144, 1
        %s2075 = scalar_lea.sflag [#allocation3], %s2074
        %s2076 = sand.u32 %s144, 1
        %s2077 = smul.addr %s2076, 256
        %s2078 = scalar_lea.vmem [#allocation2], %s2077
        // Predicated region
        $region37: #{tpu_custom_call.1} parent=35 // pred_check
          %p2079 = pneg %p154
        $region38: #{tpu_custom_call.1} parent=35 // pred_check_branch
          %2081 = sbr.rel (%p2079) target = $region40
        $region39: #{tpu_custom_call.1} parent=35 // pred_region
          %2083 = vsyncadd %s2075, 0
          %s2084 = smul.addr %s22, 32
          %s2085 = sadd.s32 %s23, %s2084
          %s2086 = smul.addr %s2085, 8
          %s2087 = scalar_lea.hbm %s4, %s2086
          %s2088 = sshll.u32 %s2078, 4
          %s2089 = int_to_ptr.vmem [resolvable:$true] %s2088
          %s2090 = sshll.u32 %s2087, 4
          %s2091 = int_to_ptr.hbm [resolvable:$true] %s2090
          %2096 = dma.vmem_to_hbm [thread:$0]  %s2089, 4096, %s2091, %s2075, 128, 128, 8
        $region40: #{tpu_custom_call.1} parent=35 // pred_fallthru
          _
      $region36: #{tpu_custom_call.1} parent=5 // pred_fallthru
        _
      %p2097 = scmp.le.s32.totalorder 2, %s13
      // Predicated region
      $region41: #{tpu_custom_call.1} parent=5 // pred_check
        %p2098 = pneg %p2097
      $region42: #{tpu_custom_call.1} parent=5 // pred_check_branch
        %2100 = sbr.rel (%p2098) target = $region44
      $region43: #{tpu_custom_call.1} parent=5 // pred_region
        %s2101 = ssub.s32 %s13, 2
        // Predicated region
        $region45: #{tpu_custom_call.1} parent=43 // pred_check
          %p2102 = pneg %p160
        $region46: #{tpu_custom_call.1} parent=43 // pred_check_branch
          %2104 = sbr.rel (%p2102) target = $region48
        $region47: #{tpu_custom_call.1} parent=43 // pred_region
          %s2105 = sand.u32 %s145, 1
          %s2106 = scalar_lea.sflag [#allocation3], %s2105
          %s2107 = sand.u32 %s145, 1
          %s2108 = smul.addr %s2107, 256
          %s2109 = scalar_lea.vmem [#allocation2], %s2108
          %2111 = dma.done %s2106, 4096
        $region48: #{tpu_custom_call.1} parent=43 // pred_fallthru
          _
      $region44: #{tpu_custom_call.1} parent=5 // pred_fallthru
        _
    $region6: #{tpu_custom_call.1} parent=1 // loop_footer
      %s17 = sadd.s32 1, %s13
    $region7: #{tpu_custom_call.1} parent=1 // loop_footer_branch
      %12 = sbr.rel target = $region3
    $region8: #{tpu_custom_call.1} parent=1 // loop_exit
      _
    %2112 = vsyncpa [#allocation3], 1
    %s2113 = scalar_lea.sflag [#allocation3], 1
    %2114 = vsyncpa %s2113, 1

</llo_original>
